<compile_context>
chip_gen: v5e
topology: v5e:2x2
jax: 0.10.0
libtpu: 0.0.40
codegen_flags: <defaults>
</compile_context>

<pallas_src>
import math

import jax
import jax.numpy as jnp
from jax import lax
from jax.experimental import pallas as pl
from jax.experimental.pallas import tpu as pltpu  # noqa: F401  (TPU backend import)

# ---- model hyperparams (module globals in the PyTorch source) ----
d_model = 32
n_heads = 4
d_k = 8
d_v = 8
LN_EPS = 1e-5


def multi_head_attention(params, input_Q, input_K, input_V, attn_mask, *, need_attn=True):
    """
    input_Q/K/V: [B, S, d_model] float32
    attn_mask:   [B, S, S] bool (True == masked position)
    returns (output [B, S, d_model], attn [B, n_heads, S, S] or None)
    """
    B, S, _ = input_Q.shape
    BH = B * n_heads

    # Additive mask (0 / -1e9) computed once in the wrapper: replaces the
    # in-kernel int cast + per-head compare/select with one broadcasted add.
    mask_add = jnp.where(attn_mask, jnp.float32(-1e9), jnp.float32(0.0))

    def kernel(xq_ref, xk_ref, xv_ref, wq_ref, wk_ref, wv_ref, wfc_ref, m_ref,
               out_ref, *attn_out):
        # -- leading-dim broadcast helpers (major dims only -> layout no-ops) --
        def per_head(x):      # [B, ...] -> [B*H, ...]  (replicate each batch per head)
            return jnp.broadcast_to(x[:, None], (B, n_heads) + x.shape[1:]
                                    ).reshape((BH,) + x.shape[1:])

        def per_batch(w):     # [H, a, b] -> [B*H, a, b]  (replicate weights per batch)
            return jnp.broadcast_to(w[None], (B,) + w.shape
                                    ).reshape((BH,) + w.shape[1:])

        xq = xq_ref[...]                                     # [B, S, D] (also the residual)

        # ---- Q/K/V projections, batched over n = b*H + h (MXU NT form) ------
        q = jnp.einsum('nsd,ned->nse', per_head(xq), per_batch(wq_ref[...]),
                       preferred_element_type=jnp.float32)            # [B*H, S, d_k]
        k = jnp.einsum('nsd,ned->nse', per_head(xk_ref[...]), per_batch(wk_ref[...]),
                       preferred_element_type=jnp.float32)            # [B*H, S, d_k]
        v = jnp.einsum('nsd,ned->nse', per_head(xv_ref[...]), per_batch(wv_ref[...]),
                       preferred_element_type=jnp.float32)            # [B*H, S, d_v]

        # ---- scaled dot-product attention, one batched pass over B*H --------
        s = jnp.einsum('nqd,nkd->nqk', q, k,
                       preferred_element_type=jnp.float32) / jnp.float32(math.sqrt(d_k))
        s = s + per_head(m_ref[...])                                   # additive mask

        mx = jnp.max(s, axis=-1, keepdims=True)
        e = jnp.exp(s - mx)
        p = e / jnp.sum(e, axis=-1, keepdims=True)                     # exact softmax

        if need_attn:
            attn_out[0][...] = p                                       # one dense store

        ctx = jnp.einsum('nqk,nkd->nqd', p, v,
                         preferred_element_type=jnp.float32)           # [B*H, S, d_v]

        # ---- output projection per head + head-sum (no lane concat) ---------
        oc = jnp.einsum('nsd,nod->nso', ctx, per_batch(wfc_ref[...]),
                        preferred_element_type=jnp.float32)            # [B*H, S, D]
        oc = oc.reshape(B, n_heads, S, d_model)
        x = oc[:, 0]
        for h in range(1, n_heads):                                    # 3 vector adds
            x = x + oc[:, h]

        # ---- residual + LayerNorm (fresh LN each call -> gamma=1, beta=0) ---
        x = x + xq
        mu = jnp.mean(x, axis=-1, keepdims=True)
        var = jnp.mean((x - mu) ** 2, axis=-1, keepdims=True)          # biased var (torch LN)
        out_ref[...] = (x - mu) * lax.rsqrt(var + LN_EPS)

    out_shapes = [jax.ShapeDtypeStruct((B, S, d_model), jnp.float32)]
    if need_attn:
        out_shapes.append(jax.ShapeDtypeStruct((BH, S, S), jnp.float32))

    outs = pl.pallas_call(kernel, out_shape=tuple(out_shapes))(
        input_Q, input_K, input_V,
        params["W_Q_h"], params["W_K_h"], params["W_V_h"], params["fc_h"],
        mask_add,
    )
    if need_attn:
        out, attn_flat = outs
        return out, attn_flat.reshape(B, n_heads, S, S)   # free leading-dim split
    return outs[0], None


def init_params(key):
    """Per-head, contraction-last weight layouts, prepared once at init time."""
    k1, k2, k3, k4 = jax.random.split(key, 4)
    bound = 1.0 / math.sqrt(d_model)

    def torch_weight(k, out_f, in_f):   # nn.Linear stores [out, in]; bias=False in the module
        return jax.random.uniform(k, (out_f, in_f), jnp.float32, -bound, bound)

    W_Q = torch_weight(k1, d_k * n_heads, d_model)
    W_K = torch_weight(k2, d_k * n_heads, d_model)
    W_V = torch_weight(k3, d_v * n_heads, d_model)
    W_fc = torch_weight(k4, d_v * n_heads, d_model)   # applied to the [.., H*d_v] context

    return {
        "W_Q_h": W_Q.reshape(n_heads, d_k, d_model),   # [H, d_k, D]
        "W_K_h": W_K.reshape(n_heads, d_k, d_model),   # [H, d_k, D]
        "W_V_h": W_V.reshape(n_heads, d_v, d_model),   # [H, d_v, D]
        # fc: out[o] = sum_{h,d} ctx[h, d] * W_fc[o, h*d_v + d]   (needs d_model == H*d_v)
        "fc_h": W_fc.reshape(d_v * n_heads, n_heads, d_v).transpose(1, 0, 2),  # [H, D_out, d_v]
    }


if __name__ == "__main__":
    B, S = 2, 8
    key = jax.random.PRNGKey(0)
    kp, kq, kk, kv = jax.random.split(key, 4)

    params = init_params(kp)
    input_Q = jax.random.normal(kq, (B, S, d_model), jnp.float32)
    input_K = jax.random.normal(kk, (B, S, d_model), jnp.float32)
    input_V = jax.random.normal(kv, (B, S, d_model), jnp.float32)
    # causal mask: True above the diagonal (masked)
    attn_mask = jnp.broadcast_to(jnp.triu(jnp.ones((S, S), dtype=bool), k=1), (B, S, S))

    mha = jax.jit(multi_head_attention)
    output, attn = mha(params, input_Q, input_K, input_V, attn_mask)
    jax.block_until_ready((output, attn))

    assert output.shape == (B, S, d_model)
    assert attn.shape == (B, n_heads, S, S)
    print("KERNEL_OK")
</pallas_src>

<mosaic_0001>
module attributes {stable_mosaic.version = 11 : i64} {
  func.func @kernel(%arg0: memref<2x8x32xf32, #tpu.memory_space<vmem>>, %arg1: memref<2x8x32xf32, #tpu.memory_space<vmem>>, %arg2: memref<2x8x32xf32, #tpu.memory_space<vmem>>, %arg3: memref<4x8x32xf32, #tpu.memory_space<vmem>>, %arg4: memref<4x8x32xf32, #tpu.memory_space<vmem>>, %arg5: memref<4x8x32xf32, #tpu.memory_space<vmem>>, %arg6: memref<4x32x8xf32, #tpu.memory_space<vmem>>, %arg7: memref<2x8x8xf32, #tpu.memory_space<vmem>>, %arg8: memref<2x8x32xf32, #tpu.memory_space<vmem>>, %arg9: memref<8x8x8xf32, #tpu.memory_space<vmem>>) attributes {dimension_semantics = [], scalar_prefetch = 0 : i64, scratch_operands = 0 : i64, tpu.core_type = #tpu.core_type<tc>} {
    %c0 = arith.constant 0 : index
    %c0_0 = arith.constant 0 : index
    %c0_1 = arith.constant 0 : index
    %0 = vector.load %arg0[%c0, %c0_0, %c0_1] : memref<2x8x32xf32, #tpu.memory_space<vmem>>, vector<2x8x32xf32>
    %1 = vector.shape_cast %0 : vector<2x8x32xf32> to vector<2x1x8x32xf32>
    %2 = vector.shape_cast %1 : vector<2x1x8x32xf32> to vector<2x1x8x32xf32>
    %3 = vector.broadcast %2 : vector<2x1x8x32xf32> to vector<2x4x8x32xf32>
    %4 = vector.shape_cast %3 : vector<2x4x8x32xf32> to vector<8x8x32xf32>
    %c0_2 = arith.constant 0 : index
    %c0_3 = arith.constant 0 : index
    %c0_4 = arith.constant 0 : index
    %5 = vector.load %arg3[%c0_2, %c0_3, %c0_4] : memref<4x8x32xf32, #tpu.memory_space<vmem>>, vector<4x8x32xf32>
    %6 = vector.shape_cast %5 : vector<4x8x32xf32> to vector<1x4x8x32xf32>
    %7 = vector.shape_cast %6 : vector<1x4x8x32xf32> to vector<1x4x8x32xf32>
    %8 = vector.broadcast %7 : vector<1x4x8x32xf32> to vector<2x4x8x32xf32>
    %9 = vector.shape_cast %8 : vector<2x4x8x32xf32> to vector<8x8x32xf32>
    "tpu.trace_start"() <{level = 10 : i32, message = "nsd,ned->nse"}> : () -> ()
    %cst = arith.constant dense<0.000000e+00> : vector<8x8x8xf32>
    %10 = tpu.matmul %4, %9, %cst {dimension_numbers = #tpu.dot_dimension_numbers<[2], [2], [1], [1], [0, 0, 0, 1, 1, 1], [0], [0]>} : vector<8x8x32xf32>, vector<8x8x32xf32>, vector<8x8x8xf32> -> vector<8x8x8xf32>
    "tpu.trace_stop"() : () -> ()
    %c0_5 = arith.constant 0 : index
    %c0_6 = arith.constant 0 : index
    %c0_7 = arith.constant 0 : index
    %11 = vector.load %arg1[%c0_5, %c0_6, %c0_7] : memref<2x8x32xf32, #tpu.memory_space<vmem>>, vector<2x8x32xf32>
    %12 = vector.shape_cast %11 : vector<2x8x32xf32> to vector<2x1x8x32xf32>
    %13 = vector.shape_cast %12 : vector<2x1x8x32xf32> to vector<2x1x8x32xf32>
    %14 = vector.broadcast %13 : vector<2x1x8x32xf32> to vector<2x4x8x32xf32>
    %15 = vector.shape_cast %14 : vector<2x4x8x32xf32> to vector<8x8x32xf32>
    %c0_8 = arith.constant 0 : index
    %c0_9 = arith.constant 0 : index
    %c0_10 = arith.constant 0 : index
    %16 = vector.load %arg4[%c0_8, %c0_9, %c0_10] : memref<4x8x32xf32, #tpu.memory_space<vmem>>, vector<4x8x32xf32>
    %17 = vector.shape_cast %16 : vector<4x8x32xf32> to vector<1x4x8x32xf32>
    %18 = vector.shape_cast %17 : vector<1x4x8x32xf32> to vector<1x4x8x32xf32>
    %19 = vector.broadcast %18 : vector<1x4x8x32xf32> to vector<2x4x8x32xf32>
    %20 = vector.shape_cast %19 : vector<2x4x8x32xf32> to vector<8x8x32xf32>
    "tpu.trace_start"() <{level = 10 : i32, message = "nsd,ned->nse"}> : () -> ()
    %cst_11 = arith.constant dense<0.000000e+00> : vector<8x8x8xf32>
    %21 = tpu.matmul %15, %20, %cst_11 {dimension_numbers = #tpu.dot_dimension_numbers<[2], [2], [1], [1], [0, 0, 0, 1, 1, 1], [0], [0]>} : vector<8x8x32xf32>, vector<8x8x32xf32>, vector<8x8x8xf32> -> vector<8x8x8xf32>
    "tpu.trace_stop"() : () -> ()
    %c0_12 = arith.constant 0 : index
    %c0_13 = arith.constant 0 : index
    %c0_14 = arith.constant 0 : index
    %22 = vector.load %arg2[%c0_12, %c0_13, %c0_14] : memref<2x8x32xf32, #tpu.memory_space<vmem>>, vector<2x8x32xf32>
    %23 = vector.shape_cast %22 : vector<2x8x32xf32> to vector<2x1x8x32xf32>
    %24 = vector.shape_cast %23 : vector<2x1x8x32xf32> to vector<2x1x8x32xf32>
    %25 = vector.broadcast %24 : vector<2x1x8x32xf32> to vector<2x4x8x32xf32>
    %26 = vector.shape_cast %25 : vector<2x4x8x32xf32> to vector<8x8x32xf32>
    %c0_15 = arith.constant 0 : index
    %c0_16 = arith.constant 0 : index
    %c0_17 = arith.constant 0 : index
    %27 = vector.load %arg5[%c0_15, %c0_16, %c0_17] : memref<4x8x32xf32, #tpu.memory_space<vmem>>, vector<4x8x32xf32>
    %28 = vector.shape_cast %27 : vector<4x8x32xf32> to vector<1x4x8x32xf32>
    %29 = vector.shape_cast %28 : vector<1x4x8x32xf32> to vector<1x4x8x32xf32>
    %30 = vector.broadcast %29 : vector<1x4x8x32xf32> to vector<2x4x8x32xf32>
    %31 = vector.shape_cast %30 : vector<2x4x8x32xf32> to vector<8x8x32xf32>
    "tpu.trace_start"() <{level = 10 : i32, message = "nsd,ned->nse"}> : () -> ()
    %cst_18 = arith.constant dense<0.000000e+00> : vector<8x8x8xf32>
    %32 = tpu.matmul %26, %31, %cst_18 {dimension_numbers = #tpu.dot_dimension_numbers<[2], [2], [1], [1], [0, 0, 0, 1, 1, 1], [0], [0]>} : vector<8x8x32xf32>, vector<8x8x32xf32>, vector<8x8x8xf32> -> vector<8x8x8xf32>
    "tpu.trace_stop"() : () -> ()
    "tpu.trace_start"() <{level = 10 : i32, message = "nqd,nkd->nqk"}> : () -> ()
    %cst_19 = arith.constant dense<0.000000e+00> : vector<8x8x8xf32>
    %33 = tpu.matmul %10, %21, %cst_19 {dimension_numbers = #tpu.dot_dimension_numbers<[2], [2], [1], [1], [0, 0, 0, 1, 1, 1], [0], [0]>} : vector<8x8x8xf32>, vector<8x8x8xf32>, vector<8x8x8xf32> -> vector<8x8x8xf32>
    "tpu.trace_stop"() : () -> ()
    %cst_20 = arith.constant 2.82842708 : f32
    %34 = vector.broadcast %cst_20 : f32 to vector<8x8x8xf32>
    %35 = arith.divf %33, %34 : vector<8x8x8xf32>
    %c0_21 = arith.constant 0 : index
    %c0_22 = arith.constant 0 : index
    %c0_23 = arith.constant 0 : index
    %36 = vector.load %arg7[%c0_21, %c0_22, %c0_23] : memref<2x8x8xf32, #tpu.memory_space<vmem>>, vector<2x8x8xf32>
    %37 = vector.shape_cast %36 : vector<2x8x8xf32> to vector<2x1x8x8xf32>
    %38 = vector.shape_cast %37 : vector<2x1x8x8xf32> to vector<2x1x8x8xf32>
    %39 = vector.broadcast %38 : vector<2x1x8x8xf32> to vector<2x4x8x8xf32>
    %40 = vector.shape_cast %39 : vector<2x4x8x8xf32> to vector<8x8x8xf32>
    %41 = arith.addf %35, %40 : vector<8x8x8xf32>
    %cst_24 = arith.constant dense<0xFF800000> : vector<8x8xf32>
    %42 = vector.multi_reduction <maximumf>, %41, %cst_24 [2] : vector<8x8x8xf32> to vector<8x8xf32>
    %43 = vector.shape_cast %42 : vector<8x8xf32> to vector<8x8x1xf32>
    %44 = vector.broadcast %43 : vector<8x8x1xf32> to vector<8x8x8xf32>
    %45 = arith.subf %41, %44 : vector<8x8x8xf32>
    %46 = math.exp %45 : vector<8x8x8xf32>
    %cst_25 = arith.constant dense<0.000000e+00> : vector<8x8xf32>
    %47 = vector.multi_reduction <add>, %46, %cst_25 [2] : vector<8x8x8xf32> to vector<8x8xf32>
    %48 = vector.shape_cast %47 : vector<8x8xf32> to vector<8x8x1xf32>
    %49 = vector.broadcast %48 : vector<8x8x1xf32> to vector<8x8x8xf32>
    %50 = arith.divf %46, %49 : vector<8x8x8xf32>
    %c0_26 = arith.constant 0 : index
    %c0_27 = arith.constant 0 : index
    %c0_28 = arith.constant 0 : index
    %51 = vector.load %arg9[%c0_26, %c0_27, %c0_28] : memref<8x8x8xf32, #tpu.memory_space<vmem>>, vector<8x8x8xf32>
    tpu.vector_store %arg9[%c0_26, %c0_27, %c0_28], %50 {strides = array<i32>} : memref<8x8x8xf32, #tpu.memory_space<vmem>>, vector<8x8x8xf32>,
    "tpu.trace_start"() <{level = 10 : i32, message = "nqk,nkd->nqd"}> : () -> ()
    %cst_29 = arith.constant dense<0.000000e+00> : vector<8x8x8xf32>
    %52 = tpu.matmul %50, %32, %cst_29 {dimension_numbers = #tpu.dot_dimension_numbers<[2], [1], [1], [2], [0, 0, 0, 1, 1, 2], [0], [0]>} : vector<8x8x8xf32>, vector<8x8x8xf32>, vector<8x8x8xf32> -> vector<8x8x8xf32>
    "tpu.trace_stop"() : () -> ()
    %c0_30 = arith.constant 0 : index
    %c0_31 = arith.constant 0 : index
    %c0_32 = arith.constant 0 : index
    %53 = vector.load %arg6[%c0_30, %c0_31, %c0_32] : memref<4x32x8xf32, #tpu.memory_space<vmem>>, vector<4x32x8xf32>
    %54 = vector.shape_cast %53 : vector<4x32x8xf32> to vector<1x4x32x8xf32>
    %55 = vector.shape_cast %54 : vector<1x4x32x8xf32> to vector<1x4x32x8xf32>
    %56 = vector.broadcast %55 : vector<1x4x32x8xf32> to vector<2x4x32x8xf32>
    %57 = vector.shape_cast %56 : vector<2x4x32x8xf32> to vector<8x32x8xf32>
    "tpu.trace_start"() <{level = 10 : i32, message = "nsd,nod->nso"}> : () -> ()
    %cst_33 = arith.constant dense<0.000000e+00> : vector<8x8x32xf32>
    %58 = tpu.matmul %52, %57, %cst_33 {dimension_numbers = #tpu.dot_dimension_numbers<[2], [2], [1], [1], [0, 0, 0, 1, 1, 1], [0], [0]>} : vector<8x8x8xf32>, vector<8x32x8xf32>, vector<8x8x32xf32> -> vector<8x8x32xf32>
    "tpu.trace_stop"() : () -> ()
    %59 = vector.shape_cast %58 : vector<8x8x32xf32> to vector<2x4x8x32xf32>
    %60 = vector.extract_strided_slice %59 {offsets = [0, 0, 0, 0], sizes = [2, 1, 8, 32], strides = [1, 1, 1, 1]} : vector<2x4x8x32xf32> to vector<2x1x8x32xf32>
    %61 = vector.shape_cast %60 : vector<2x1x8x32xf32> to vector<2x8x32xf32>
    %62 = vector.extract_strided_slice %59 {offsets = [0, 1, 0, 0], sizes = [2, 1, 8, 32], strides = [1, 1, 1, 1]} : vector<2x4x8x32xf32> to vector<2x1x8x32xf32>
    %63 = vector.shape_cast %62 : vector<2x1x8x32xf32> to vector<2x8x32xf32>
    %64 = arith.addf %61, %63 : vector<2x8x32xf32>
    %65 = vector.extract_strided_slice %59 {offsets = [0, 2, 0, 0], sizes = [2, 1, 8, 32], strides = [1, 1, 1, 1]} : vector<2x4x8x32xf32> to vector<2x1x8x32xf32>
    %66 = vector.shape_cast %65 : vector<2x1x8x32xf32> to vector<2x8x32xf32>
    %67 = arith.addf %64, %66 : vector<2x8x32xf32>
    %68 = vector.extract_strided_slice %59 {offsets = [0, 3, 0, 0], sizes = [2, 1, 8, 32], strides = [1, 1, 1, 1]} : vector<2x4x8x32xf32> to vector<2x1x8x32xf32>
    %69 = vector.shape_cast %68 : vector<2x1x8x32xf32> to vector<2x8x32xf32>
    %70 = arith.addf %67, %69 : vector<2x8x32xf32>
    %71 = arith.addf %70, %0 : vector<2x8x32xf32>
    %cst_34 = arith.constant dense<0.000000e+00> : vector<2x8xf32>
    %72 = vector.multi_reduction <add>, %71, %cst_34 [2] : vector<2x8x32xf32> to vector<2x8xf32>
    %73 = vector.shape_cast %72 : vector<2x8xf32> to vector<2x8x1xf32>
    %cst_35 = arith.constant 3.200000e+01 : f32
    %74 = vector.broadcast %cst_35 : f32 to vector<2x8x1xf32>
    %75 = arith.divf %73, %74 : vector<2x8x1xf32>
    %76 = vector.broadcast %75 : vector<2x8x1xf32> to vector<2x8x32xf32>
    %77 = arith.subf %71, %76 : vector<2x8x32xf32>
    %78 = arith.mulf %77, %77 : vector<2x8x32xf32>
    %cst_36 = arith.constant dense<0.000000e+00> : vector<2x8xf32>
    %79 = vector.multi_reduction <add>, %78, %cst_36 [2] : vector<2x8x32xf32> to vector<2x8xf32>
    %80 = vector.shape_cast %79 : vector<2x8xf32> to vector<2x8x1xf32>
    %cst_37 = arith.constant 3.200000e+01 : f32
    %81 = vector.broadcast %cst_37 : f32 to vector<2x8x1xf32>
    %82 = arith.divf %80, %81 : vector<2x8x1xf32>
    %83 = vector.broadcast %75 : vector<2x8x1xf32> to vector<2x8x32xf32>
    %84 = arith.subf %71, %83 : vector<2x8x32xf32>
    %cst_38 = arith.constant 9.99999974E-6 : f32
    %85 = vector.broadcast %cst_38 : f32 to vector<2x8x1xf32>
    %86 = arith.addf %82, %85 : vector<2x8x1xf32>
    %87 = math.rsqrt %86 : vector<2x8x1xf32>
    %88 = vector.broadcast %87 : vector<2x8x1xf32> to vector<2x8x32xf32>
    %89 = arith.mulf %84, %88 : vector<2x8x32xf32>
    %c0_39 = arith.constant 0 : index
    %c0_40 = arith.constant 0 : index
    %c0_41 = arith.constant 0 : index
    %90 = vector.load %arg8[%c0_39, %c0_40, %c0_41] : memref<2x8x32xf32, #tpu.memory_space<vmem>>, vector<2x8x32xf32>
    tpu.vector_store %arg8[%c0_39, %c0_40, %c0_41], %89 {strides = array<i32>} : memref<2x8x32xf32, #tpu.memory_space<vmem>>, vector<2x8x32xf32>,
    return
  }
}

</mosaic_0001>

<llo_original>
// kernel: multi_head_attention.1
$region0: #{multi_head_attention.1}
  #allocation0 [shape = 'u32[]', space=smem, size = 0x4, offset = 0x4, fixed_abs, tag = 'smem constant byte address 0x4 - core index']
  #allocation1 [shape = 'u32[72,128]{1,0:T(1,128)}', space=vmem, size = 0x9000, scoped, tag = 'internal scratch']
  %s0 = inlined_call_operand.vmem [shape: f32[2,8,32], index: 0, kind: input, shape index: {}]
  %s1 = inlined_call_operand.vmem [shape: f32[2,8,32], index: 1, kind: input, shape index: {}]
  %s2 = inlined_call_operand.vmem [shape: f32[2,8,32], index: 2, kind: input, shape index: {}]
  %s3 = inlined_call_operand.vmem [shape: f32[4,8,32], index: 3, kind: input, shape index: {}]
  %s4 = inlined_call_operand.vmem [shape: f32[4,8,32], index: 4, kind: input, shape index: {}]
  %s5 = inlined_call_operand.vmem [shape: f32[4,8,32], index: 5, kind: input, shape index: {}]
  %s6 = inlined_call_operand.vmem [shape: f32[4,32,8], index: 6, kind: input, shape index: {}]
  %s7 = inlined_call_operand.vmem [shape: f32[2,8,8], index: 7, kind: input, shape index: {}]
  %s8 = inlined_call_operand.hbm [shape: f32[2,8,32], index: 8, kind: output, shape index: {0}]
  %s9 = inlined_call_operand.hbm [shape: f32[8,8,8], index: 9, kind: output, shape index: {1}]
  %10 = xla_tuple %s8, %s9
  %s11 = sld [smem:[#allocation0]]
  $region50: #{multi_head_attention.1} parent=0
    _
  %s13 = ssub.s32 1, %s11
  %s14 = scalar_select 0, %s13, %s11
  $region1: #{multi_head_attention.1} parent=0
    #allocation2 [shape = 'u8[8192]{0}', space=vmem, size = 0x2000, scoped, tag = 'output window, operand 0, single buffered']
    #allocation3 [shape = 's32[1]{0}', space=sflag, size = 0x4, scoped, tag = 'scoped memory for multi_head_attention.1']
    #allocation4 [shape = 'u8[32768]{0}', space=vmem, size = 0x8000, scoped, tag = 'output window, operand 1, single buffered']
    #allocation5 [shape = 's32[1]{0}', space=sflag, size = 0x4, scoped, tag = 'scoped memory for multi_head_attention.1']
    %15 = vsyncpa [#allocation3], 0
    %16 = vsyncpa [#allocation5], 0
    // Predicated region
    $region2: #{multi_head_attention.1} parent=1 // pred_check
      _
    $region3: #{multi_head_attention.1} parent=1 // pred_check_branch
      %18 = sbr.rel (0) target = $region5
    $region4: #{multi_head_attention.1} parent=1 // pred_region
      _
    $region5: #{multi_head_attention.1} parent=1 // pred_fallthru
      _
    // Predicated region
    $region6: #{multi_head_attention.1} parent=1 // pred_check
      _
    $region7: #{multi_head_attention.1} parent=1 // pred_check_branch
      %20 = sbr.rel (0) target = $region9
    $region8: #{multi_head_attention.1} parent=1 // pred_region
      _
    $region9: #{multi_head_attention.1} parent=1 // pred_fallthru
      _
    // Predicated region
    $region10: #{multi_head_attention.1} parent=1 // pred_check
      _
    $region11: #{multi_head_attention.1} parent=1 // pred_check_branch
      %22 = sbr.rel (0) target = $region13
    $region12: #{multi_head_attention.1} parent=1 // pred_region
      _
    $region13: #{multi_head_attention.1} parent=1 // pred_fallthru
      _
    // Predicated region
    $region14: #{multi_head_attention.1} parent=1 // pred_check
      _
    $region15: #{multi_head_attention.1} parent=1 // pred_check_branch
      %24 = sbr.rel (0) target = $region17
    $region16: #{multi_head_attention.1} parent=1 // pred_region
      _
    $region17: #{multi_head_attention.1} parent=1 // pred_fallthru
      _
    // Predicated region
    $region18: #{multi_head_attention.1} parent=1 // pred_check
      _
    $region19: #{multi_head_attention.1} parent=1 // pred_check_branch
      %26 = sbr.rel (0) target = $region21
    $region20: #{multi_head_attention.1} parent=1 // pred_region
      _
    $region21: #{multi_head_attention.1} parent=1 // pred_fallthru
      _
    // Predicated region
    $region22: #{multi_head_attention.1} parent=1 // pred_check
      _
    $region23: #{multi_head_attention.1} parent=1 // pred_check_branch
      %28 = sbr.rel (0) target = $region25
    $region24: #{multi_head_attention.1} parent=1 // pred_region
      _
    $region25: #{multi_head_attention.1} parent=1 // pred_fallthru
      _
    // Predicated region
    $region26: #{multi_head_attention.1} parent=1 // pred_check
      _
    $region27: #{multi_head_attention.1} parent=1 // pred_check_branch
      %30 = sbr.rel (0) target = $region29
    $region28: #{multi_head_attention.1} parent=1 // pred_region
      _
    $region29: #{multi_head_attention.1} parent=1 // pred_fallthru
      _
    // Predicated region
    $region30: #{multi_head_attention.1} parent=1 // pred_check
      _
    $region31: #{multi_head_attention.1} parent=1 // pred_check_branch
      %32 = sbr.rel (0) target = $region33
    $region32: #{multi_head_attention.1} parent=1 // pred_region
      _
    $region33: #{multi_head_attention.1} parent=1 // pred_fallthru
      _
    %v33 = vld [vmem:[%s0] sm:$0xff]
    %v34 = vld [vmem:[%s0 + $0x8] sm:$0xff]
    %v35 = vld [vmem:[%s3] sm:$0xff]
    %v36 = vld [vmem:[%s3 + $0x8] sm:$0xff]
    %v37 = vld [vmem:[%s3 + $0x10] sm:$0xff]
    %v38 = vld [vmem:[%s3 + $0x18] sm:$0xff]
    %vm39 = vcmask 261120
    %v41 = vsel %vm39, %v33, 0
    %v44 = vsel %vm39, %v35, 0
    %46 = vmatpush.xpose.msra.mxu0 0.0
    %47 = vmatpush.xpose.msra.mxu0 0.0
    %48 = vmatpush.xpose.msra.mxu0 0.0
    %49 = vmatpush.xpose.msra.mxu0 0.0
    %50 = vmatpush.xpose.msra.mxu0 0.0
    %51 = vmatpush.xpose.msra.mxu0 0.0
    %52 = vmatpush.xpose.msra.mxu0 0.0
    %53 = vmatpush.xpose.msra.mxu0 0.0
    %54 = vmatpush.xpose.msra.mxu0 0.0
    %55 = vmatpush.xpose.msra.mxu0 0.0
    %56 = vmatpush.xpose.msra.mxu0 0.0
    %57 = vmatpush.xpose.msra.mxu0 0.0
    %58 = vmatpush.xpose.msra.mxu0 0.0
    %59 = vmatpush.xpose.msra.mxu0 0.0
    %60 = vmatpush.xpose.msra.mxu0 0.0
    %61 = vmatpush.xpose.msra.mxu0 %v44
    %62 = vmatmul.f32.gmra.mxu0 %v41
    %v63 = vpop.f32.mrf.mxu0
    %v64 = vadd.f32 0.0, %v63
    %65 = vdwg.mxu0
    %v67 = vsel %vm39, %v36, 0
    %69 = vmatpush.xpose.msra.mxu0 0.0
    %70 = vmatpush.xpose.msra.mxu0 0.0
    %71 = vmatpush.xpose.msra.mxu0 0.0
    %72 = vmatpush.xpose.msra.mxu0 0.0
    %73 = vmatpush.xpose.msra.mxu0 0.0
    %74 = vmatpush.xpose.msra.mxu0 0.0
    %75 = vmatpush.xpose.msra.mxu0 0.0
    %76 = vmatpush.xpose.msra.mxu0 0.0
    %77 = vmatpush.xpose.msra.mxu0 0.0
    %78 = vmatpush.xpose.msra.mxu0 0.0
    %79 = vmatpush.xpose.msra.mxu0 0.0
    %80 = vmatpush.xpose.msra.mxu0 0.0
    %81 = vmatpush.xpose.msra.mxu0 0.0
    %82 = vmatpush.xpose.msra.mxu0 0.0
    %83 = vmatpush.xpose.msra.mxu0 0.0
    %84 = vmatpush.xpose.msra.mxu0 %v67
    %85 = vmatmul.f32.gmra.mxu0 %v41
    %v86 = vpop.f32.mrf.mxu0
    %v87 = vadd.f32 0.0, %v86
    %88 = vdwg.mxu0
    %v90 = vsel %vm39, %v37, 0
    %92 = vmatpush.xpose.msra.mxu0 0.0
    %93 = vmatpush.xpose.msra.mxu0 0.0
    %94 = vmatpush.xpose.msra.mxu0 0.0
    %95 = vmatpush.xpose.msra.mxu0 0.0
    %96 = vmatpush.xpose.msra.mxu0 0.0
    %97 = vmatpush.xpose.msra.mxu0 0.0
    %98 = vmatpush.xpose.msra.mxu0 0.0
    %99 = vmatpush.xpose.msra.mxu0 0.0
    %100 = vmatpush.xpose.msra.mxu0 0.0
    %101 = vmatpush.xpose.msra.mxu0 0.0
    %102 = vmatpush.xpose.msra.mxu0 0.0
    %103 = vmatpush.xpose.msra.mxu0 0.0
    %104 = vmatpush.xpose.msra.mxu0 0.0
    %105 = vmatpush.xpose.msra.mxu0 0.0
    %106 = vmatpush.xpose.msra.mxu0 0.0
    %107 = vmatpush.xpose.msra.mxu0 %v90
    %108 = vmatmul.f32.gmra.mxu0 %v41
    %v109 = vpop.f32.mrf.mxu0
    %v110 = vadd.f32 0.0, %v109
    %111 = vdwg.mxu0
    %v113 = vsel %vm39, %v38, 0
    %115 = vmatpush.xpose.msra.mxu0 0.0
    %116 = vmatpush.xpose.msra.mxu0 0.0
    %117 = vmatpush.xpose.msra.mxu0 0.0
    %118 = vmatpush.xpose.msra.mxu0 0.0
    %119 = vmatpush.xpose.msra.mxu0 0.0
    %120 = vmatpush.xpose.msra.mxu0 0.0
    %121 = vmatpush.xpose.msra.mxu0 0.0
    %122 = vmatpush.xpose.msra.mxu0 0.0
    %123 = vmatpush.xpose.msra.mxu0 0.0
    %124 = vmatpush.xpose.msra.mxu0 0.0
    %125 = vmatpush.xpose.msra.mxu0 0.0
    %126 = vmatpush.xpose.msra.mxu0 0.0
    %127 = vmatpush.xpose.msra.mxu0 0.0
    %128 = vmatpush.xpose.msra.mxu0 0.0
    %129 = vmatpush.xpose.msra.mxu0 0.0
    %130 = vmatpush.xpose.msra.mxu0 %v113
    %131 = vmatmul.f32.gmra.mxu0 %v41
    %v132 = vpop.f32.mrf.mxu0
    %v133 = vadd.f32 0.0, %v132
    %134 = vdwg.mxu0
    %v136 = vsel %vm39, %v34, 0
    %138 = vmatpush.xpose.msra.mxu0 0.0
    %139 = vmatpush.xpose.msra.mxu0 0.0
    %140 = vmatpush.xpose.msra.mxu0 0.0
    %141 = vmatpush.xpose.msra.mxu0 0.0
    %142 = vmatpush.xpose.msra.mxu0 0.0
    %143 = vmatpush.xpose.msra.mxu0 0.0
    %144 = vmatpush.xpose.msra.mxu0 0.0
    %145 = vmatpush.xpose.msra.mxu0 0.0
    %146 = vmatpush.xpose.msra.mxu0 0.0
    %147 = vmatpush.xpose.msra.mxu0 0.0
    %148 = vmatpush.xpose.msra.mxu0 0.0
    %149 = vmatpush.xpose.msra.mxu0 0.0
    %150 = vmatpush.xpose.msra.mxu0 0.0
    %151 = vmatpush.xpose.msra.mxu0 0.0
    %152 = vmatpush.xpose.msra.mxu0 0.0
    %153 = vmatpush.xpose.msra.mxu0 %v44
    %154 = vmatmul.f32.gmra.mxu0 %v136
    %v155 = vpop.f32.mrf.mxu0
    %v156 = vadd.f32 0.0, %v155
    %157 = vdwg.mxu0
    %158 = vmatpush.xpose.msra.mxu0 0.0
    %159 = vmatpush.xpose.msra.mxu0 0.0
    %160 = vmatpush.xpose.msra.mxu0 0.0
    %161 = vmatpush.xpose.msra.mxu0 0.0
    %162 = vmatpush.xpose.msra.mxu0 0.0
    %163 = vmatpush.xpose.msra.mxu0 0.0
    %164 = vmatpush.xpose.msra.mxu0 0.0
    %165 = vmatpush.xpose.msra.mxu0 0.0
    %166 = vmatpush.xpose.msra.mxu0 0.0
    %167 = vmatpush.xpose.msra.mxu0 0.0
    %168 = vmatpush.xpose.msra.mxu0 0.0
    %169 = vmatpush.xpose.msra.mxu0 0.0
    %170 = vmatpush.xpose.msra.mxu0 0.0
    %171 = vmatpush.xpose.msra.mxu0 0.0
    %172 = vmatpush.xpose.msra.mxu0 0.0
    %173 = vmatpush.xpose.msra.mxu0 %v67
    %174 = vmatmul.f32.gmra.mxu0 %v136
    %v175 = vpop.f32.mrf.mxu0
    %v176 = vadd.f32 0.0, %v175
    %177 = vdwg.mxu0
    %178 = vmatpush.xpose.msra.mxu0 0.0
    %179 = vmatpush.xpose.msra.mxu0 0.0
    %180 = vmatpush.xpose.msra.mxu0 0.0
    %181 = vmatpush.xpose.msra.mxu0 0.0
    %182 = vmatpush.xpose.msra.mxu0 0.0
    %183 = vmatpush.xpose.msra.mxu0 0.0
    %184 = vmatpush.xpose.msra.mxu0 0.0
    %185 = vmatpush.xpose.msra.mxu0 0.0
    %186 = vmatpush.xpose.msra.mxu0 0.0
    %187 = vmatpush.xpose.msra.mxu0 0.0
    %188 = vmatpush.xpose.msra.mxu0 0.0
    %189 = vmatpush.xpose.msra.mxu0 0.0
    %190 = vmatpush.xpose.msra.mxu0 0.0
    %191 = vmatpush.xpose.msra.mxu0 0.0
    %192 = vmatpush.xpose.msra.mxu0 0.0
    %193 = vmatpush.xpose.msra.mxu0 %v90
    %194 = vmatmul.f32.gmra.mxu0 %v136
    %v195 = vpop.f32.mrf.mxu0
    %v196 = vadd.f32 0.0, %v195
    %197 = vdwg.mxu0
    %198 = vmatpush.xpose.msra.mxu0 0.0
    %199 = vmatpush.xpose.msra.mxu0 0.0
    %200 = vmatpush.xpose.msra.mxu0 0.0
    %201 = vmatpush.xpose.msra.mxu0 0.0
    %202 = vmatpush.xpose.msra.mxu0 0.0
    %203 = vmatpush.xpose.msra.mxu0 0.0
    %204 = vmatpush.xpose.msra.mxu0 0.0
    %205 = vmatpush.xpose.msra.mxu0 0.0
    %206 = vmatpush.xpose.msra.mxu0 0.0
    %207 = vmatpush.xpose.msra.mxu0 0.0
    %208 = vmatpush.xpose.msra.mxu0 0.0
    %209 = vmatpush.xpose.msra.mxu0 0.0
    %210 = vmatpush.xpose.msra.mxu0 0.0
    %211 = vmatpush.xpose.msra.mxu0 0.0
    %212 = vmatpush.xpose.msra.mxu0 0.0
    %213 = vmatpush.xpose.msra.mxu0 %v113
    %214 = vmatmul.f32.gmra.mxu0 %v136
    %v215 = vpop.f32.mrf.mxu0
    %v216 = vadd.f32 0.0, %v215
    %217 = vdwg.mxu0
    %v218 = vld [vmem:[%s1] sm:$0xff]
    %v219 = vld [vmem:[%s1 + $0x8] sm:$0xff]
    %v220 = vld [vmem:[%s4] sm:$0xff]
    %v221 = vld [vmem:[%s4 + $0x8] sm:$0xff]
    %v222 = vld [vmem:[%s4 + $0x10] sm:$0xff]
    %v223 = vld [vmem:[%s4 + $0x18] sm:$0xff]
    %v225 = vsel %vm39, %v218, 0
    %v228 = vsel %vm39, %v220, 0
    %230 = vmatpush.xpose.msra.mxu0 0.0
    %231 = vmatpush.xpose.msra.mxu0 0.0
    %232 = vmatpush.xpose.msra.mxu0 0.0
    %233 = vmatpush.xpose.msra.mxu0 0.0
    %234 = vmatpush.xpose.msra.mxu0 0.0
    %235 = vmatpush.xpose.msra.mxu0 0.0
    %236 = vmatpush.xpose.msra.mxu0 0.0
    %237 = vmatpush.xpose.msra.mxu0 0.0
    %238 = vmatpush.xpose.msra.mxu0 0.0
    %239 = vmatpush.xpose.msra.mxu0 0.0
    %240 = vmatpush.xpose.msra.mxu0 0.0
    %241 = vmatpush.xpose.msra.mxu0 0.0
    %242 = vmatpush.xpose.msra.mxu0 0.0
    %243 = vmatpush.xpose.msra.mxu0 0.0
    %244 = vmatpush.xpose.msra.mxu0 0.0
    %245 = vmatpush.xpose.msra.mxu0 %v228
    %246 = vmatmul.f32.gmra.mxu0 %v225
    %v247 = vpop.f32.mrf.mxu0
    %v248 = vadd.f32 0.0, %v247
    %249 = vdwg.mxu0
    %v251 = vsel %vm39, %v221, 0
    %253 = vmatpush.xpose.msra.mxu0 0.0
    %254 = vmatpush.xpose.msra.mxu0 0.0
    %255 = vmatpush.xpose.msra.mxu0 0.0
    %256 = vmatpush.xpose.msra.mxu0 0.0
    %257 = vmatpush.xpose.msra.mxu0 0.0
    %258 = vmatpush.xpose.msra.mxu0 0.0
    %259 = vmatpush.xpose.msra.mxu0 0.0
    %260 = vmatpush.xpose.msra.mxu0 0.0
    %261 = vmatpush.xpose.msra.mxu0 0.0
    %262 = vmatpush.xpose.msra.mxu0 0.0
    %263 = vmatpush.xpose.msra.mxu0 0.0
    %264 = vmatpush.xpose.msra.mxu0 0.0
    %265 = vmatpush.xpose.msra.mxu0 0.0
    %266 = vmatpush.xpose.msra.mxu0 0.0
    %267 = vmatpush.xpose.msra.mxu0 0.0
    %268 = vmatpush.xpose.msra.mxu0 %v251
    %269 = vmatmul.f32.gmra.mxu0 %v225
    %v270 = vpop.f32.mrf.mxu0
    %v271 = vadd.f32 0.0, %v270
    %272 = vdwg.mxu0
    %v274 = vsel %vm39, %v222, 0
    %276 = vmatpush.xpose.msra.mxu0 0.0
    %277 = vmatpush.xpose.msra.mxu0 0.0
    %278 = vmatpush.xpose.msra.mxu0 0.0
    %279 = vmatpush.xpose.msra.mxu0 0.0
    %280 = vmatpush.xpose.msra.mxu0 0.0
    %281 = vmatpush.xpose.msra.mxu0 0.0
    %282 = vmatpush.xpose.msra.mxu0 0.0
    %283 = vmatpush.xpose.msra.mxu0 0.0
    %284 = vmatpush.xpose.msra.mxu0 0.0
    %285 = vmatpush.xpose.msra.mxu0 0.0
    %286 = vmatpush.xpose.msra.mxu0 0.0
    %287 = vmatpush.xpose.msra.mxu0 0.0
    %288 = vmatpush.xpose.msra.mxu0 0.0
    %289 = vmatpush.xpose.msra.mxu0 0.0
    %290 = vmatpush.xpose.msra.mxu0 0.0
    %291 = vmatpush.xpose.msra.mxu0 %v274
    %292 = vmatmul.f32.gmra.mxu0 %v225
    %v293 = vpop.f32.mrf.mxu0
    %v294 = vadd.f32 0.0, %v293
    %295 = vdwg.mxu0
    %v297 = vsel %vm39, %v223, 0
    %299 = vmatpush.xpose.msra.mxu0 0.0
    %300 = vmatpush.xpose.msra.mxu0 0.0
    %301 = vmatpush.xpose.msra.mxu0 0.0
    %302 = vmatpush.xpose.msra.mxu0 0.0
    %303 = vmatpush.xpose.msra.mxu0 0.0
    %304 = vmatpush.xpose.msra.mxu0 0.0
    %305 = vmatpush.xpose.msra.mxu0 0.0
    %306 = vmatpush.xpose.msra.mxu0 0.0
    %307 = vmatpush.xpose.msra.mxu0 0.0
    %308 = vmatpush.xpose.msra.mxu0 0.0
    %309 = vmatpush.xpose.msra.mxu0 0.0
    %310 = vmatpush.xpose.msra.mxu0 0.0
    %311 = vmatpush.xpose.msra.mxu0 0.0
    %312 = vmatpush.xpose.msra.mxu0 0.0
    %313 = vmatpush.xpose.msra.mxu0 0.0
    %314 = vmatpush.xpose.msra.mxu0 %v297
    %315 = vmatmul.f32.gmra.mxu0 %v225
    %v316 = vpop.f32.mrf.mxu0
    %v317 = vadd.f32 0.0, %v316
    %318 = vdwg.mxu0
    %v320 = vsel %vm39, %v219, 0
    %322 = vmatpush.xpose.msra.mxu0 0.0
    %323 = vmatpush.xpose.msra.mxu0 0.0
    %324 = vmatpush.xpose.msra.mxu0 0.0
    %325 = vmatpush.xpose.msra.mxu0 0.0
    %326 = vmatpush.xpose.msra.mxu0 0.0
    %327 = vmatpush.xpose.msra.mxu0 0.0
    %328 = vmatpush.xpose.msra.mxu0 0.0
    %329 = vmatpush.xpose.msra.mxu0 0.0
    %330 = vmatpush.xpose.msra.mxu0 0.0
    %331 = vmatpush.xpose.msra.mxu0 0.0
    %332 = vmatpush.xpose.msra.mxu0 0.0
    %333 = vmatpush.xpose.msra.mxu0 0.0
    %334 = vmatpush.xpose.msra.mxu0 0.0
    %335 = vmatpush.xpose.msra.mxu0 0.0
    %336 = vmatpush.xpose.msra.mxu0 0.0
    %337 = vmatpush.xpose.msra.mxu0 %v228
    %338 = vmatmul.f32.gmra.mxu0 %v320
    %v339 = vpop.f32.mrf.mxu0
    %v340 = vadd.f32 0.0, %v339
    %341 = vdwg.mxu0
    %342 = vmatpush.xpose.msra.mxu0 0.0
    %343 = vmatpush.xpose.msra.mxu0 0.0
    %344 = vmatpush.xpose.msra.mxu0 0.0
    %345 = vmatpush.xpose.msra.mxu0 0.0
    %346 = vmatpush.xpose.msra.mxu0 0.0
    %347 = vmatpush.xpose.msra.mxu0 0.0
    %348 = vmatpush.xpose.msra.mxu0 0.0
    %349 = vmatpush.xpose.msra.mxu0 0.0
    %350 = vmatpush.xpose.msra.mxu0 0.0
    %351 = vmatpush.xpose.msra.mxu0 0.0
    %352 = vmatpush.xpose.msra.mxu0 0.0
    %353 = vmatpush.xpose.msra.mxu0 0.0
    %354 = vmatpush.xpose.msra.mxu0 0.0
    %355 = vmatpush.xpose.msra.mxu0 0.0
    %356 = vmatpush.xpose.msra.mxu0 0.0
    %357 = vmatpush.xpose.msra.mxu0 %v251
    %358 = vmatmul.f32.gmra.mxu0 %v320
    %v359 = vpop.f32.mrf.mxu0
    %v360 = vadd.f32 0.0, %v359
    %361 = vdwg.mxu0
    %362 = vmatpush.xpose.msra.mxu0 0.0
    %363 = vmatpush.xpose.msra.mxu0 0.0
    %364 = vmatpush.xpose.msra.mxu0 0.0
    %365 = vmatpush.xpose.msra.mxu0 0.0
    %366 = vmatpush.xpose.msra.mxu0 0.0
    %367 = vmatpush.xpose.msra.mxu0 0.0
    %368 = vmatpush.xpose.msra.mxu0 0.0
    %369 = vmatpush.xpose.msra.mxu0 0.0
    %370 = vmatpush.xpose.msra.mxu0 0.0
    %371 = vmatpush.xpose.msra.mxu0 0.0
    %372 = vmatpush.xpose.msra.mxu0 0.0
    %373 = vmatpush.xpose.msra.mxu0 0.0
    %374 = vmatpush.xpose.msra.mxu0 0.0
    %375 = vmatpush.xpose.msra.mxu0 0.0
    %376 = vmatpush.xpose.msra.mxu0 0.0
    %377 = vmatpush.xpose.msra.mxu0 %v274
    %378 = vmatmul.f32.gmra.mxu0 %v320
    %v379 = vpop.f32.mrf.mxu0
    %v380 = vadd.f32 0.0, %v379
    %381 = vdwg.mxu0
    %382 = vmatpush.xpose.msra.mxu0 0.0
    %383 = vmatpush.xpose.msra.mxu0 0.0
    %384 = vmatpush.xpose.msra.mxu0 0.0
    %385 = vmatpush.xpose.msra.mxu0 0.0
    %386 = vmatpush.xpose.msra.mxu0 0.0
    %387 = vmatpush.xpose.msra.mxu0 0.0
    %388 = vmatpush.xpose.msra.mxu0 0.0
    %389 = vmatpush.xpose.msra.mxu0 0.0
    %390 = vmatpush.xpose.msra.mxu0 0.0
    %391 = vmatpush.xpose.msra.mxu0 0.0
    %392 = vmatpush.xpose.msra.mxu0 0.0
    %393 = vmatpush.xpose.msra.mxu0 0.0
    %394 = vmatpush.xpose.msra.mxu0 0.0
    %395 = vmatpush.xpose.msra.mxu0 0.0
    %396 = vmatpush.xpose.msra.mxu0 0.0
    %397 = vmatpush.xpose.msra.mxu0 %v297
    %398 = vmatmul.f32.gmra.mxu0 %v320
    %v399 = vpop.f32.mrf.mxu0
    %v400 = vadd.f32 0.0, %v399
    %401 = vdwg.mxu0
    %v402 = vld [vmem:[%s2] sm:$0xff]
    %v403 = vld [vmem:[%s2 + $0x8] sm:$0xff]
    %v404 = vld [vmem:[%s5] sm:$0xff]
    %v405 = vld [vmem:[%s5 + $0x8] sm:$0xff]
    %v406 = vld [vmem:[%s5 + $0x10] sm:$0xff]
    %v407 = vld [vmem:[%s5 + $0x18] sm:$0xff]
    %v409 = vsel %vm39, %v402, 0
    %v412 = vsel %vm39, %v404, 0
    %414 = vmatpush.xpose.msra.mxu0 0.0
    %415 = vmatpush.xpose.msra.mxu0 0.0
    %416 = vmatpush.xpose.msra.mxu0 0.0
    %417 = vmatpush.xpose.msra.mxu0 0.0
    %418 = vmatpush.xpose.msra.mxu0 0.0
    %419 = vmatpush.xpose.msra.mxu0 0.0
    %420 = vmatpush.xpose.msra.mxu0 0.0
    %421 = vmatpush.xpose.msra.mxu0 0.0
    %422 = vmatpush.xpose.msra.mxu0 0.0
    %423 = vmatpush.xpose.msra.mxu0 0.0
    %424 = vmatpush.xpose.msra.mxu0 0.0
    %425 = vmatpush.xpose.msra.mxu0 0.0
    %426 = vmatpush.xpose.msra.mxu0 0.0
    %427 = vmatpush.xpose.msra.mxu0 0.0
    %428 = vmatpush.xpose.msra.mxu0 0.0
    %429 = vmatpush.xpose.msra.mxu0 %v412
    %430 = vmatmul.f32.gmra.mxu0 %v409
    %v431 = vpop.f32.mrf.mxu0
    %v432 = vadd.f32 0.0, %v431
    %433 = vdwg.mxu0
    %v435 = vsel %vm39, %v405, 0
    %437 = vmatpush.xpose.msra.mxu0 0.0
    %438 = vmatpush.xpose.msra.mxu0 0.0
    %439 = vmatpush.xpose.msra.mxu0 0.0
    %440 = vmatpush.xpose.msra.mxu0 0.0
    %441 = vmatpush.xpose.msra.mxu0 0.0
    %442 = vmatpush.xpose.msra.mxu0 0.0
    %443 = vmatpush.xpose.msra.mxu0 0.0
    %444 = vmatpush.xpose.msra.mxu0 0.0
    %445 = vmatpush.xpose.msra.mxu0 0.0
    %446 = vmatpush.xpose.msra.mxu0 0.0
    %447 = vmatpush.xpose.msra.mxu0 0.0
    %448 = vmatpush.xpose.msra.mxu0 0.0
    %449 = vmatpush.xpose.msra.mxu0 0.0
    %450 = vmatpush.xpose.msra.mxu0 0.0
    %451 = vmatpush.xpose.msra.mxu0 0.0
    %452 = vmatpush.xpose.msra.mxu0 %v435
    %453 = vmatmul.f32.gmra.mxu0 %v409
    %v454 = vpop.f32.mrf.mxu0
    %v455 = vadd.f32 0.0, %v454
    %456 = vdwg.mxu0
    %v458 = vsel %vm39, %v406, 0
    %460 = vmatpush.xpose.msra.mxu0 0.0
    %461 = vmatpush.xpose.msra.mxu0 0.0
    %462 = vmatpush.xpose.msra.mxu0 0.0
    %463 = vmatpush.xpose.msra.mxu0 0.0
    %464 = vmatpush.xpose.msra.mxu0 0.0
    %465 = vmatpush.xpose.msra.mxu0 0.0
    %466 = vmatpush.xpose.msra.mxu0 0.0
    %467 = vmatpush.xpose.msra.mxu0 0.0
    %468 = vmatpush.xpose.msra.mxu0 0.0
    %469 = vmatpush.xpose.msra.mxu0 0.0
    %470 = vmatpush.xpose.msra.mxu0 0.0
    %471 = vmatpush.xpose.msra.mxu0 0.0
    %472 = vmatpush.xpose.msra.mxu0 0.0
    %473 = vmatpush.xpose.msra.mxu0 0.0
    %474 = vmatpush.xpose.msra.mxu0 0.0
    %475 = vmatpush.xpose.msra.mxu0 %v458
    %476 = vmatmul.f32.gmra.mxu0 %v409
    %v477 = vpop.f32.mrf.mxu0
    %v478 = vadd.f32 0.0, %v477
    %479 = vdwg.mxu0
    %v481 = vsel %vm39, %v407, 0
    %483 = vmatpush.xpose.msra.mxu0 0.0
    %484 = vmatpush.xpose.msra.mxu0 0.0
    %485 = vmatpush.xpose.msra.mxu0 0.0
    %486 = vmatpush.xpose.msra.mxu0 0.0
    %487 = vmatpush.xpose.msra.mxu0 0.0
    %488 = vmatpush.xpose.msra.mxu0 0.0
    %489 = vmatpush.xpose.msra.mxu0 0.0
    %490 = vmatpush.xpose.msra.mxu0 0.0
    %491 = vmatpush.xpose.msra.mxu0 0.0
    %492 = vmatpush.xpose.msra.mxu0 0.0
    %493 = vmatpush.xpose.msra.mxu0 0.0
    %494 = vmatpush.xpose.msra.mxu0 0.0
    %495 = vmatpush.xpose.msra.mxu0 0.0
    %496 = vmatpush.xpose.msra.mxu0 0.0
    %497 = vmatpush.xpose.msra.mxu0 0.0
    %498 = vmatpush.xpose.msra.mxu0 %v481
    %499 = vmatmul.f32.gmra.mxu0 %v409
    %v500 = vpop.f32.mrf.mxu0
    %v501 = vadd.f32 0.0, %v500
    %502 = vdwg.mxu0
    %v504 = vsel %vm39, %v403, 0
    %506 = vmatpush.xpose.msra.mxu0 0.0
    %507 = vmatpush.xpose.msra.mxu0 0.0
    %508 = vmatpush.xpose.msra.mxu0 0.0
    %509 = vmatpush.xpose.msra.mxu0 0.0
    %510 = vmatpush.xpose.msra.mxu0 0.0
    %511 = vmatpush.xpose.msra.mxu0 0.0
    %512 = vmatpush.xpose.msra.mxu0 0.0
    %513 = vmatpush.xpose.msra.mxu0 0.0
    %514 = vmatpush.xpose.msra.mxu0 0.0
    %515 = vmatpush.xpose.msra.mxu0 0.0
    %516 = vmatpush.xpose.msra.mxu0 0.0
    %517 = vmatpush.xpose.msra.mxu0 0.0
    %518 = vmatpush.xpose.msra.mxu0 0.0
    %519 = vmatpush.xpose.msra.mxu0 0.0
    %520 = vmatpush.xpose.msra.mxu0 0.0
    %521 = vmatpush.xpose.msra.mxu0 %v412
    %522 = vmatmul.f32.gmra.mxu0 %v504
    %v523 = vpop.f32.mrf.mxu0
    %v524 = vadd.f32 0.0, %v523
    %525 = vdwg.mxu0
    %526 = vmatpush.xpose.msra.mxu0 0.0
    %527 = vmatpush.xpose.msra.mxu0 0.0
    %528 = vmatpush.xpose.msra.mxu0 0.0
    %529 = vmatpush.xpose.msra.mxu0 0.0
    %530 = vmatpush.xpose.msra.mxu0 0.0
    %531 = vmatpush.xpose.msra.mxu0 0.0
    %532 = vmatpush.xpose.msra.mxu0 0.0
    %533 = vmatpush.xpose.msra.mxu0 0.0
    %534 = vmatpush.xpose.msra.mxu0 0.0
    %535 = vmatpush.xpose.msra.mxu0 0.0
    %536 = vmatpush.xpose.msra.mxu0 0.0
    %537 = vmatpush.xpose.msra.mxu0 0.0
    %538 = vmatpush.xpose.msra.mxu0 0.0
    %539 = vmatpush.xpose.msra.mxu0 0.0
    %540 = vmatpush.xpose.msra.mxu0 0.0
    %541 = vmatpush.xpose.msra.mxu0 %v435
    %542 = vmatmul.f32.gmra.mxu0 %v504
    %v543 = vpop.f32.mrf.mxu0
    %v544 = vadd.f32 0.0, %v543
    %545 = vdwg.mxu0
    %546 = vmatpush.xpose.msra.mxu0 0.0
    %547 = vmatpush.xpose.msra.mxu0 0.0
    %548 = vmatpush.xpose.msra.mxu0 0.0
    %549 = vmatpush.xpose.msra.mxu0 0.0
    %550 = vmatpush.xpose.msra.mxu0 0.0
    %551 = vmatpush.xpose.msra.mxu0 0.0
    %552 = vmatpush.xpose.msra.mxu0 0.0
    %553 = vmatpush.xpose.msra.mxu0 0.0
    %554 = vmatpush.xpose.msra.mxu0 0.0
    %555 = vmatpush.xpose.msra.mxu0 0.0
    %556 = vmatpush.xpose.msra.mxu0 0.0
    %557 = vmatpush.xpose.msra.mxu0 0.0
    %558 = vmatpush.xpose.msra.mxu0 0.0
    %559 = vmatpush.xpose.msra.mxu0 0.0
    %560 = vmatpush.xpose.msra.mxu0 0.0
    %561 = vmatpush.xpose.msra.mxu0 %v458
    %562 = vmatmul.f32.gmra.mxu0 %v504
    %v563 = vpop.f32.mrf.mxu0
    %v564 = vadd.f32 0.0, %v563
    %565 = vdwg.mxu0
    %566 = vmatpush.xpose.msra.mxu0 0.0
    %567 = vmatpush.xpose.msra.mxu0 0.0
    %568 = vmatpush.xpose.msra.mxu0 0.0
    %569 = vmatpush.xpose.msra.mxu0 0.0
    %570 = vmatpush.xpose.msra.mxu0 0.0
    %571 = vmatpush.xpose.msra.mxu0 0.0
    %572 = vmatpush.xpose.msra.mxu0 0.0
    %573 = vmatpush.xpose.msra.mxu0 0.0
    %574 = vmatpush.xpose.msra.mxu0 0.0
    %575 = vmatpush.xpose.msra.mxu0 0.0
    %576 = vmatpush.xpose.msra.mxu0 0.0
    %577 = vmatpush.xpose.msra.mxu0 0.0
    %578 = vmatpush.xpose.msra.mxu0 0.0
    %579 = vmatpush.xpose.msra.mxu0 0.0
    %580 = vmatpush.xpose.msra.mxu0 0.0
    %581 = vmatpush.xpose.msra.mxu0 %v481
    %582 = vmatmul.f32.gmra.mxu0 %v504
    %v583 = vpop.f32.mrf.mxu0
    %v584 = vadd.f32 0.0, %v583
    %585 = vdwg.mxu0
    %vm586 = vcmask 64512
    %v588 = vsel %vm586, %v64, 0
    %v591 = vsel %vm586, %v248, 0
    %593 = vmatpush.xpose.msra.mxu0 0.0
    %594 = vmatpush.xpose.msra.mxu0 0.0
    %595 = vmatpush.xpose.msra.mxu0 0.0
    %596 = vmatpush.xpose.msra.mxu0 0.0
    %597 = vmatpush.xpose.msra.mxu0 0.0
    %598 = vmatpush.xpose.msra.mxu0 0.0
    %599 = vmatpush.xpose.msra.mxu0 0.0
    %600 = vmatpush.xpose.msra.mxu0 0.0
    %601 = vmatpush.xpose.msra.mxu0 0.0
    %602 = vmatpush.xpose.msra.mxu0 0.0
    %603 = vmatpush.xpose.msra.mxu0 0.0
    %604 = vmatpush.xpose.msra.mxu0 0.0
    %605 = vmatpush.xpose.msra.mxu0 0.0
    %606 = vmatpush.xpose.msra.mxu0 0.0
    %607 = vmatpush.xpose.msra.mxu0 0.0
    %608 = vmatpush.xpose.msra.mxu0 %v591
    %609 = vmatmul.f32.gmra.mxu0 %v588
    %v610 = vpop.f32.mrf.mxu0
    %v611 = vadd.f32 0.0, %v610
    %612 = vdwg.mxu0
    %v614 = vsel %vm586, %v87, 0
    %v617 = vsel %vm586, %v271, 0
    %619 = vmatpush.xpose.msra.mxu0 0.0
    %620 = vmatpush.xpose.msra.mxu0 0.0
    %621 = vmatpush.xpose.msra.mxu0 0.0
    %622 = vmatpush.xpose.msra.mxu0 0.0
    %623 = vmatpush.xpose.msra.mxu0 0.0
    %624 = vmatpush.xpose.msra.mxu0 0.0
    %625 = vmatpush.xpose.msra.mxu0 0.0
    %626 = vmatpush.xpose.msra.mxu0 0.0
    %627 = vmatpush.xpose.msra.mxu0 0.0
    %628 = vmatpush.xpose.msra.mxu0 0.0
    %629 = vmatpush.xpose.msra.mxu0 0.0
    %630 = vmatpush.xpose.msra.mxu0 0.0
    %631 = vmatpush.xpose.msra.mxu0 0.0
    %632 = vmatpush.xpose.msra.mxu0 0.0
    %633 = vmatpush.xpose.msra.mxu0 0.0
    %634 = vmatpush.xpose.msra.mxu0 %v617
    %635 = vmatmul.f32.gmra.mxu0 %v614
    %v636 = vpop.f32.mrf.mxu0
    %v637 = vadd.f32 0.0, %v636
    %638 = vdwg.mxu0
    %v640 = vsel %vm586, %v110, 0
    %v643 = vsel %vm586, %v294, 0
    %645 = vmatpush.xpose.msra.mxu0 0.0
    %646 = vmatpush.xpose.msra.mxu0 0.0
    %647 = vmatpush.xpose.msra.mxu0 0.0
    %648 = vmatpush.xpose.msra.mxu0 0.0
    %649 = vmatpush.xpose.msra.mxu0 0.0
    %650 = vmatpush.xpose.msra.mxu0 0.0
    %651 = vmatpush.xpose.msra.mxu0 0.0
    %652 = vmatpush.xpose.msra.mxu0 0.0
    %653 = vmatpush.xpose.msra.mxu0 0.0
    %654 = vmatpush.xpose.msra.mxu0 0.0
    %655 = vmatpush.xpose.msra.mxu0 0.0
    %656 = vmatpush.xpose.msra.mxu0 0.0
    %657 = vmatpush.xpose.msra.mxu0 0.0
    %658 = vmatpush.xpose.msra.mxu0 0.0
    %659 = vmatpush.xpose.msra.mxu0 0.0
    %660 = vmatpush.xpose.msra.mxu0 %v643
    %661 = vmatmul.f32.gmra.mxu0 %v640
    %v662 = vpop.f32.mrf.mxu0
    %v663 = vadd.f32 0.0, %v662
    %664 = vdwg.mxu0
    %v666 = vsel %vm586, %v133, 0
    %v669 = vsel %vm586, %v317, 0
    %671 = vmatpush.xpose.msra.mxu0 0.0
    %672 = vmatpush.xpose.msra.mxu0 0.0
    %673 = vmatpush.xpose.msra.mxu0 0.0
    %674 = vmatpush.xpose.msra.mxu0 0.0
    %675 = vmatpush.xpose.msra.mxu0 0.0
    %676 = vmatpush.xpose.msra.mxu0 0.0
    %677 = vmatpush.xpose.msra.mxu0 0.0
    %678 = vmatpush.xpose.msra.mxu0 0.0
    %679 = vmatpush.xpose.msra.mxu0 0.0
    %680 = vmatpush.xpose.msra.mxu0 0.0
    %681 = vmatpush.xpose.msra.mxu0 0.0
    %682 = vmatpush.xpose.msra.mxu0 0.0
    %683 = vmatpush.xpose.msra.mxu0 0.0
    %684 = vmatpush.xpose.msra.mxu0 0.0
    %685 = vmatpush.xpose.msra.mxu0 0.0
    %686 = vmatpush.xpose.msra.mxu0 %v669
    %687 = vmatmul.f32.gmra.mxu0 %v666
    %v688 = vpop.f32.mrf.mxu0
    %v689 = vadd.f32 0.0, %v688
    %690 = vdwg.mxu0
    %v692 = vsel %vm586, %v156, 0
    %v695 = vsel %vm586, %v340, 0
    %697 = vmatpush.xpose.msra.mxu0 0.0
    %698 = vmatpush.xpose.msra.mxu0 0.0
    %699 = vmatpush.xpose.msra.mxu0 0.0
    %700 = vmatpush.xpose.msra.mxu0 0.0
    %701 = vmatpush.xpose.msra.mxu0 0.0
    %702 = vmatpush.xpose.msra.mxu0 0.0
    %703 = vmatpush.xpose.msra.mxu0 0.0
    %704 = vmatpush.xpose.msra.mxu0 0.0
    %705 = vmatpush.xpose.msra.mxu0 0.0
    %706 = vmatpush.xpose.msra.mxu0 0.0
    %707 = vmatpush.xpose.msra.mxu0 0.0
    %708 = vmatpush.xpose.msra.mxu0 0.0
    %709 = vmatpush.xpose.msra.mxu0 0.0
    %710 = vmatpush.xpose.msra.mxu0 0.0
    %711 = vmatpush.xpose.msra.mxu0 0.0
    %712 = vmatpush.xpose.msra.mxu0 %v695
    %713 = vmatmul.f32.gmra.mxu0 %v692
    %v714 = vpop.f32.mrf.mxu0
    %v715 = vadd.f32 0.0, %v714
    %716 = vdwg.mxu0
    %v718 = vsel %vm586, %v176, 0
    %v721 = vsel %vm586, %v360, 0
    %723 = vmatpush.xpose.msra.mxu0 0.0
    %724 = vmatpush.xpose.msra.mxu0 0.0
    %725 = vmatpush.xpose.msra.mxu0 0.0
    %726 = vmatpush.xpose.msra.mxu0 0.0
    %727 = vmatpush.xpose.msra.mxu0 0.0
    %728 = vmatpush.xpose.msra.mxu0 0.0
    %729 = vmatpush.xpose.msra.mxu0 0.0
    %730 = vmatpush.xpose.msra.mxu0 0.0
    %731 = vmatpush.xpose.msra.mxu0 0.0
    %732 = vmatpush.xpose.msra.mxu0 0.0
    %733 = vmatpush.xpose.msra.mxu0 0.0
    %734 = vmatpush.xpose.msra.mxu0 0.0
    %735 = vmatpush.xpose.msra.mxu0 0.0
    %736 = vmatpush.xpose.msra.mxu0 0.0
    %737 = vmatpush.xpose.msra.mxu0 0.0
    %738 = vmatpush.xpose.msra.mxu0 %v721
    %739 = vmatmul.f32.gmra.mxu0 %v718
    %v740 = vpop.f32.mrf.mxu0
    %v741 = vadd.f32 0.0, %v740
    %742 = vdwg.mxu0
    %v744 = vsel %vm586, %v196, 0
    %v747 = vsel %vm586, %v380, 0
    %749 = vmatpush.xpose.msra.mxu0 0.0
    %750 = vmatpush.xpose.msra.mxu0 0.0
    %751 = vmatpush.xpose.msra.mxu0 0.0
    %752 = vmatpush.xpose.msra.mxu0 0.0
    %753 = vmatpush.xpose.msra.mxu0 0.0
    %754 = vmatpush.xpose.msra.mxu0 0.0
    %755 = vmatpush.xpose.msra.mxu0 0.0
    %756 = vmatpush.xpose.msra.mxu0 0.0
    %757 = vmatpush.xpose.msra.mxu0 0.0
    %758 = vmatpush.xpose.msra.mxu0 0.0
    %759 = vmatpush.xpose.msra.mxu0 0.0
    %760 = vmatpush.xpose.msra.mxu0 0.0
    %761 = vmatpush.xpose.msra.mxu0 0.0
    %762 = vmatpush.xpose.msra.mxu0 0.0
    %763 = vmatpush.xpose.msra.mxu0 0.0
    %764 = vmatpush.xpose.msra.mxu0 %v747
    %765 = vmatmul.f32.gmra.mxu0 %v744
    %v766 = vpop.f32.mrf.mxu0
    %v767 = vadd.f32 0.0, %v766
    %768 = vdwg.mxu0
    %v770 = vsel %vm586, %v216, 0
    %v773 = vsel %vm586, %v400, 0
    %775 = vmatpush.xpose.msra.mxu0 0.0
    %776 = vmatpush.xpose.msra.mxu0 0.0
    %777 = vmatpush.xpose.msra.mxu0 0.0
    %778 = vmatpush.xpose.msra.mxu0 0.0
    %779 = vmatpush.xpose.msra.mxu0 0.0
    %780 = vmatpush.xpose.msra.mxu0 0.0
    %781 = vmatpush.xpose.msra.mxu0 0.0
    %782 = vmatpush.xpose.msra.mxu0 0.0
    %783 = vmatpush.xpose.msra.mxu0 0.0
    %784 = vmatpush.xpose.msra.mxu0 0.0
    %785 = vmatpush.xpose.msra.mxu0 0.0
    %786 = vmatpush.xpose.msra.mxu0 0.0
    %787 = vmatpush.xpose.msra.mxu0 0.0
    %788 = vmatpush.xpose.msra.mxu0 0.0
    %789 = vmatpush.xpose.msra.mxu0 0.0
    %790 = vmatpush.xpose.msra.mxu0 %v773
    %791 = vmatmul.f32.gmra.mxu0 %v770
    %v792 = vpop.f32.mrf.mxu0
    %v793 = vadd.f32 0.0, %v792
    %794 = vdwg.mxu0
    %v795 = vrcp.pop 2.828427
    %v796 = vmul.f32 2.828427, %v795
    %v797 = vsub.f32 1.0, %v796
    %v798 = vmul.f32 %v795, %v797
    %v799 = vadd.f32 %v795, %v798
    %vm800 = vweird.f32 %v795
    %v801 = vsel %vm800, %v795, %v799
    %v802 = vmul.f32 %v611, %v801
    %v803 = vmul.f32 %v637, %v801
    %v804 = vmul.f32 %v663, %v801
    %v805 = vmul.f32 %v689, %v801
    %v806 = vmul.f32 %v715, %v801
    %v807 = vmul.f32 %v741, %v801
    %v808 = vmul.f32 %v767, %v801
    %v809 = vmul.f32 %v793, %v801
    %v810 = vld [vmem:[%s7] sm:$0xff]
    %v811 = vld [vmem:[%s7 + $0x8] sm:$0xff]
    %v812 = vadd.f32 %v802, %v810
    %v813 = vadd.f32 %v803, %v810
    %v814 = vadd.f32 %v804, %v810
    %v815 = vadd.f32 %v805, %v810
    %v816 = vadd.f32 %v806, %v811
    %v817 = vadd.f32 %v807, %v811
    %v818 = vadd.f32 %v808, %v811
    %v819 = vadd.f32 %v809, %v811
    %v820 = vsel %vm586, %v812, -inf
    %821 = vmax.xlane.f32.xlu0 %v820
    %v822 = vpop.xlane.xlu0 %821
    %v823 = vsel %vm586, %v813, -inf
    %824 = vmax.xlane.f32.xlu0 %v823
    %v825 = vpop.xlane.xlu0 %824
    %v826 = vsel %vm586, %v814, -inf
    %827 = vmax.xlane.f32.xlu0 %v826
    %v828 = vpop.xlane.xlu0 %827
    %v829 = vsel %vm586, %v815, -inf
    %830 = vmax.xlane.f32.xlu0 %v829
    %v831 = vpop.xlane.xlu0 %830
    %v832 = vsel %vm586, %v816, -inf
    %833 = vmax.xlane.f32.xlu0 %v832
    %v834 = vpop.xlane.xlu0 %833
    %v835 = vsel %vm586, %v817, -inf
    %836 = vmax.xlane.f32.xlu0 %v835
    %v837 = vpop.xlane.xlu0 %836
    %v838 = vsel %vm586, %v818, -inf
    %839 = vmax.xlane.f32.xlu0 %v838
    %v840 = vpop.xlane.xlu0 %839
    %v841 = vsel %vm586, %v819, -inf
    %842 = vmax.xlane.f32.xlu0 %v841
    %v843 = vpop.xlane.xlu0 %842
    %v844 = vsub.f32 %v812, %v822
    %v845 = vsub.f32 %v813, %v825
    %v846 = vsub.f32 %v814, %v828
    %v847 = vsub.f32 %v815, %v831
    %v848 = vsub.f32 %v816, %v834
    %v849 = vsub.f32 %v817, %v837
    %v850 = vsub.f32 %v818, %v840
    %v851 = vsub.f32 %v819, %v843
    %v852 = vmul.f32 %v844, 1.442695
    %v853 = vpow.pop %v852
    %v854 = vmul.f32 %v845, 1.442695
    %v855 = vpow.pop %v854
    %v856 = vmul.f32 %v846, 1.442695
    %v857 = vpow.pop %v856
    %v858 = vmul.f32 %v847, 1.442695
    %v859 = vpow.pop %v858
    %v860 = vmul.f32 %v848, 1.442695
    %v861 = vpow.pop %v860
    %v862 = vmul.f32 %v849, 1.442695
    %v863 = vpow.pop %v862
    %v864 = vmul.f32 %v850, 1.442695
    %v865 = vpow.pop %v864
    %v866 = vmul.f32 %v851, 1.442695
    %v867 = vpow.pop %v866
    %v868 = vsel %vm586, %v853, 0.0
    %869 = vadd.xlane.f32.xlu0 %v868
    %v870 = vpop.xlane.xlu0 %869
    %v871 = vsel %vm586, %v855, 0.0
    %872 = vadd.xlane.f32.xlu0 %v871
    %v873 = vpop.xlane.xlu0 %872
    %v874 = vsel %vm586, %v857, 0.0
    %875 = vadd.xlane.f32.xlu0 %v874
    %v876 = vpop.xlane.xlu0 %875
    %v877 = vsel %vm586, %v859, 0.0
    %878 = vadd.xlane.f32.xlu0 %v877
    %v879 = vpop.xlane.xlu0 %878
    %v880 = vsel %vm586, %v861, 0.0
    %881 = vadd.xlane.f32.xlu0 %v880
    %v882 = vpop.xlane.xlu0 %881
    %v883 = vsel %vm586, %v863, 0.0
    %884 = vadd.xlane.f32.xlu0 %v883
    %v885 = vpop.xlane.xlu0 %884
    %v886 = vsel %vm586, %v865, 0.0
    %887 = vadd.xlane.f32.xlu0 %v886
    %v888 = vpop.xlane.xlu0 %887
    %v889 = vsel %vm586, %v867, 0.0
    %890 = vadd.xlane.f32.xlu0 %v889
    %v891 = vpop.xlane.xlu0 %890
    %v892 = vrcp.pop %v870
    %v893 = vmul.f32 %v870, %v892
    %v894 = vsub.f32 1.0, %v893
    %v895 = vmul.f32 %v892, %v894
    %v896 = vadd.f32 %v892, %v895
    %vm897 = vweird.f32 %v870
    %vm898 = vweird.f32 %v892
    %vm899 = vmor %vm897, %vm898
    %v900 = vsel %vm899, %v892, %v896
    %v901 = vand.u32 2147483647, %v870
    %vm902 = vcmp.eq.f32.partialorder %v901, 8.507059e+37
    %v903 = vand.u32 %v870, 2147483648
    %v904 = vor.u32 1.1754944e-38, %v903
    %v905 = vsel %vm902, %v904, %v900
    %v906 = vmul.f32 %v853, %v905
    %v907 = vrcp.pop %v873
    %v908 = vmul.f32 %v873, %v907
    %v909 = vsub.f32 1.0, %v908
    %v910 = vmul.f32 %v907, %v909
    %v911 = vadd.f32 %v907, %v910
    %vm912 = vweird.f32 %v873
    %vm913 = vweird.f32 %v907
    %vm914 = vmor %vm912, %vm913
    %v915 = vsel %vm914, %v907, %v911
    %v916 = vand.u32 2147483647, %v873
    %vm917 = vcmp.eq.f32.partialorder %v916, 8.507059e+37
    %v918 = vand.u32 %v873, 2147483648
    %v919 = vor.u32 1.1754944e-38, %v918
    %v920 = vsel %vm917, %v919, %v915
    %v921 = vmul.f32 %v855, %v920
    %v922 = vrcp.pop %v876
    %v923 = vmul.f32 %v876, %v922
    %v924 = vsub.f32 1.0, %v923
    %v925 = vmul.f32 %v922, %v924
    %v926 = vadd.f32 %v922, %v925
    %vm927 = vweird.f32 %v876
    %vm928 = vweird.f32 %v922
    %vm929 = vmor %vm927, %vm928
    %v930 = vsel %vm929, %v922, %v926
    %v931 = vand.u32 2147483647, %v876
    %vm932 = vcmp.eq.f32.partialorder %v931, 8.507059e+37
    %v933 = vand.u32 %v876, 2147483648
    %v934 = vor.u32 1.1754944e-38, %v933
    %v935 = vsel %vm932, %v934, %v930
    %v936 = vmul.f32 %v857, %v935
    %v937 = vrcp.pop %v879
    %v938 = vmul.f32 %v879, %v937
    %v939 = vsub.f32 1.0, %v938
    %v940 = vmul.f32 %v937, %v939
    %v941 = vadd.f32 %v937, %v940
    %vm942 = vweird.f32 %v879
    %vm943 = vweird.f32 %v937
    %vm944 = vmor %vm942, %vm943
    %v945 = vsel %vm944, %v937, %v941
    %v946 = vand.u32 2147483647, %v879
    %vm947 = vcmp.eq.f32.partialorder %v946, 8.507059e+37
    %v948 = vand.u32 %v879, 2147483648
    %v949 = vor.u32 1.1754944e-38, %v948
    %v950 = vsel %vm947, %v949, %v945
    %v951 = vmul.f32 %v859, %v950
    %v952 = vrcp.pop %v882
    %v953 = vmul.f32 %v882, %v952
    %v954 = vsub.f32 1.0, %v953
    %v955 = vmul.f32 %v952, %v954
    %v956 = vadd.f32 %v952, %v955
    %vm957 = vweird.f32 %v882
    %vm958 = vweird.f32 %v952
    %vm959 = vmor %vm957, %vm958
    %v960 = vsel %vm959, %v952, %v956
    %v961 = vand.u32 2147483647, %v882
    %vm962 = vcmp.eq.f32.partialorder %v961, 8.507059e+37
    %v963 = vand.u32 %v882, 2147483648
    %v964 = vor.u32 1.1754944e-38, %v963
    %v965 = vsel %vm962, %v964, %v960
    %v966 = vmul.f32 %v861, %v965
    %v967 = vrcp.pop %v885
    %v968 = vmul.f32 %v885, %v967
    %v969 = vsub.f32 1.0, %v968
    %v970 = vmul.f32 %v967, %v969
    %v971 = vadd.f32 %v967, %v970
    %vm972 = vweird.f32 %v885
    %vm973 = vweird.f32 %v967
    %vm974 = vmor %vm972, %vm973
    %v975 = vsel %vm974, %v967, %v971
    %v976 = vand.u32 2147483647, %v885
    %vm977 = vcmp.eq.f32.partialorder %v976, 8.507059e+37
    %v978 = vand.u32 %v885, 2147483648
    %v979 = vor.u32 1.1754944e-38, %v978
    %v980 = vsel %vm977, %v979, %v975
    %v981 = vmul.f32 %v863, %v980
    %v982 = vrcp.pop %v888
    %v983 = vmul.f32 %v888, %v982
    %v984 = vsub.f32 1.0, %v983
    %v985 = vmul.f32 %v982, %v984
    %v986 = vadd.f32 %v982, %v985
    %vm987 = vweird.f32 %v888
    %vm988 = vweird.f32 %v982
    %vm989 = vmor %vm987, %vm988
    %v990 = vsel %vm989, %v982, %v986
    %v991 = vand.u32 2147483647, %v888
    %vm992 = vcmp.eq.f32.partialorder %v991, 8.507059e+37
    %v993 = vand.u32 %v888, 2147483648
    %v994 = vor.u32 1.1754944e-38, %v993
    %v995 = vsel %vm992, %v994, %v990
    %v996 = vmul.f32 %v865, %v995
    %v997 = vrcp.pop %v891
    %v998 = vmul.f32 %v891, %v997
    %v999 = vsub.f32 1.0, %v998
    %v1000 = vmul.f32 %v997, %v999
    %v1001 = vadd.f32 %v997, %v1000
    %vm1002 = vweird.f32 %v891
    %vm1003 = vweird.f32 %v997
    %vm1004 = vmor %vm1002, %vm1003
    %v1005 = vsel %vm1004, %v997, %v1001
    %v1006 = vand.u32 2147483647, %v891
    %vm1007 = vcmp.eq.f32.partialorder %v1006, 8.507059e+37
    %v1008 = vand.u32 %v891, 2147483648
    %v1009 = vor.u32 1.1754944e-38, %v1008
    %v1010 = vsel %vm1007, %v1009, %v1005
    %v1011 = vmul.f32 %v867, %v1010
    %1012 = vst.msk [vmem:[#allocation4] sm:$0xff] %vm586, %v906
    %1013 = vst.msk [vmem:[#allocation4 + $0x8] sm:$0xff] %vm586, %v921
    %1014 = vst.msk [vmem:[#allocation4 + $0x10] sm:$0xff] %vm586, %v936
    %1015 = vst.msk [vmem:[#allocation4 + $0x18] sm:$0xff] %vm586, %v951
    %1016 = vst.msk [vmem:[#allocation4 + $0x20] sm:$0xff] %vm586, %v966
    %1017 = vst.msk [vmem:[#allocation4 + $0x28] sm:$0xff] %vm586, %v981
    %1018 = vst.msk [vmem:[#allocation4 + $0x30] sm:$0xff] %vm586, %v996
    %1019 = vst.msk [vmem:[#allocation4 + $0x38] sm:$0xff] %vm586, %v1011
    %v1021 = vsel %vm586, %v906, 0
    %1023 = vmatpush.msra.mxu0 0.0
    %1024 = vmatpush.msra.mxu0 0.0
    %1025 = vmatpush.msra.mxu0 0.0
    %1026 = vmatpush.msra.mxu0 0.0
    %1027 = vmatpush.msra.mxu0 0.0
    %1028 = vmatpush.msra.mxu0 0.0
    %1029 = vmatpush.msra.mxu0 0.0
    %1030 = vmatpush.msra.mxu0 0.0
    %1031 = vmatpush.msra.mxu0 0.0
    %1032 = vmatpush.msra.mxu0 0.0
    %1033 = vmatpush.msra.mxu0 0.0
    %1034 = vmatpush.msra.mxu0 0.0
    %1035 = vmatpush.msra.mxu0 0.0
    %1036 = vmatpush.msra.mxu0 0.0
    %1037 = vmatpush.msra.mxu0 0.0
    %1038 = vmatpush.msra.mxu0 %v432
    %1039 = vmatmul.f32.gmra.mxu0 %v1021
    %v1040 = vpop.f32.mrf.mxu0
    %v1041 = vadd.f32 0.0, %v1040
    %1042 = vdwg.mxu0
    %v1044 = vsel %vm586, %v921, 0
    %1046 = vmatpush.msra.mxu0 0.0
    %1047 = vmatpush.msra.mxu0 0.0
    %1048 = vmatpush.msra.mxu0 0.0
    %1049 = vmatpush.msra.mxu0 0.0
    %1050 = vmatpush.msra.mxu0 0.0
    %1051 = vmatpush.msra.mxu0 0.0
    %1052 = vmatpush.msra.mxu0 0.0
    %1053 = vmatpush.msra.mxu0 0.0
    %1054 = vmatpush.msra.mxu0 0.0
    %1055 = vmatpush.msra.mxu0 0.0
    %1056 = vmatpush.msra.mxu0 0.0
    %1057 = vmatpush.msra.mxu0 0.0
    %1058 = vmatpush.msra.mxu0 0.0
    %1059 = vmatpush.msra.mxu0 0.0
    %1060 = vmatpush.msra.mxu0 0.0
    %1061 = vmatpush.msra.mxu0 %v455
    %1062 = vmatmul.f32.gmra.mxu0 %v1044
    %v1063 = vpop.f32.mrf.mxu0
    %v1064 = vadd.f32 0.0, %v1063
    %1065 = vdwg.mxu0
    %v1067 = vsel %vm586, %v936, 0
    %1069 = vmatpush.msra.mxu0 0.0
    %1070 = vmatpush.msra.mxu0 0.0
    %1071 = vmatpush.msra.mxu0 0.0
    %1072 = vmatpush.msra.mxu0 0.0
    %1073 = vmatpush.msra.mxu0 0.0
    %1074 = vmatpush.msra.mxu0 0.0
    %1075 = vmatpush.msra.mxu0 0.0
    %1076 = vmatpush.msra.mxu0 0.0
    %1077 = vmatpush.msra.mxu0 0.0
    %1078 = vmatpush.msra.mxu0 0.0
    %1079 = vmatpush.msra.mxu0 0.0
    %1080 = vmatpush.msra.mxu0 0.0
    %1081 = vmatpush.msra.mxu0 0.0
    %1082 = vmatpush.msra.mxu0 0.0
    %1083 = vmatpush.msra.mxu0 0.0
    %1084 = vmatpush.msra.mxu0 %v478
    %1085 = vmatmul.f32.gmra.mxu0 %v1067
    %v1086 = vpop.f32.mrf.mxu0
    %v1087 = vadd.f32 0.0, %v1086
    %1088 = vdwg.mxu0
    %v1090 = vsel %vm586, %v951, 0
    %1092 = vmatpush.msra.mxu0 0.0
    %1093 = vmatpush.msra.mxu0 0.0
    %1094 = vmatpush.msra.mxu0 0.0
    %1095 = vmatpush.msra.mxu0 0.0
    %1096 = vmatpush.msra.mxu0 0.0
    %1097 = vmatpush.msra.mxu0 0.0
    %1098 = vmatpush.msra.mxu0 0.0
    %1099 = vmatpush.msra.mxu0 0.0
    %1100 = vmatpush.msra.mxu0 0.0
    %1101 = vmatpush.msra.mxu0 0.0
    %1102 = vmatpush.msra.mxu0 0.0
    %1103 = vmatpush.msra.mxu0 0.0
    %1104 = vmatpush.msra.mxu0 0.0
    %1105 = vmatpush.msra.mxu0 0.0
    %1106 = vmatpush.msra.mxu0 0.0
    %1107 = vmatpush.msra.mxu0 %v501
    %1108 = vmatmul.f32.gmra.mxu0 %v1090
    %v1109 = vpop.f32.mrf.mxu0
    %v1110 = vadd.f32 0.0, %v1109
    %1111 = vdwg.mxu0
    %v1113 = vsel %vm586, %v966, 0
    %1115 = vmatpush.msra.mxu0 0.0
    %1116 = vmatpush.msra.mxu0 0.0
    %1117 = vmatpush.msra.mxu0 0.0
    %1118 = vmatpush.msra.mxu0 0.0
    %1119 = vmatpush.msra.mxu0 0.0
    %1120 = vmatpush.msra.mxu0 0.0
    %1121 = vmatpush.msra.mxu0 0.0
    %1122 = vmatpush.msra.mxu0 0.0
    %1123 = vmatpush.msra.mxu0 0.0
    %1124 = vmatpush.msra.mxu0 0.0
    %1125 = vmatpush.msra.mxu0 0.0
    %1126 = vmatpush.msra.mxu0 0.0
    %1127 = vmatpush.msra.mxu0 0.0
    %1128 = vmatpush.msra.mxu0 0.0
    %1129 = vmatpush.msra.mxu0 0.0
    %1130 = vmatpush.msra.mxu0 %v524
    %1131 = vmatmul.f32.gmra.mxu0 %v1113
    %v1132 = vpop.f32.mrf.mxu0
    %v1133 = vadd.f32 0.0, %v1132
    %1134 = vdwg.mxu0
    %v1136 = vsel %vm586, %v981, 0
    %1138 = vmatpush.msra.mxu0 0.0
    %1139 = vmatpush.msra.mxu0 0.0
    %1140 = vmatpush.msra.mxu0 0.0
    %1141 = vmatpush.msra.mxu0 0.0
    %1142 = vmatpush.msra.mxu0 0.0
    %1143 = vmatpush.msra.mxu0 0.0
    %1144 = vmatpush.msra.mxu0 0.0
    %1145 = vmatpush.msra.mxu0 0.0
    %1146 = vmatpush.msra.mxu0 0.0
    %1147 = vmatpush.msra.mxu0 0.0
    %1148 = vmatpush.msra.mxu0 0.0
    %1149 = vmatpush.msra.mxu0 0.0
    %1150 = vmatpush.msra.mxu0 0.0
    %1151 = vmatpush.msra.mxu0 0.0
    %1152 = vmatpush.msra.mxu0 0.0
    %1153 = vmatpush.msra.mxu0 %v544
    %1154 = vmatmul.f32.gmra.mxu0 %v1136
    %v1155 = vpop.f32.mrf.mxu0
    %v1156 = vadd.f32 0.0, %v1155
    %1157 = vdwg.mxu0
    %v1159 = vsel %vm586, %v996, 0
    %1161 = vmatpush.msra.mxu0 0.0
    %1162 = vmatpush.msra.mxu0 0.0
    %1163 = vmatpush.msra.mxu0 0.0
    %1164 = vmatpush.msra.mxu0 0.0
    %1165 = vmatpush.msra.mxu0 0.0
    %1166 = vmatpush.msra.mxu0 0.0
    %1167 = vmatpush.msra.mxu0 0.0
    %1168 = vmatpush.msra.mxu0 0.0
    %1169 = vmatpush.msra.mxu0 0.0
    %1170 = vmatpush.msra.mxu0 0.0
    %1171 = vmatpush.msra.mxu0 0.0
    %1172 = vmatpush.msra.mxu0 0.0
    %1173 = vmatpush.msra.mxu0 0.0
    %1174 = vmatpush.msra.mxu0 0.0
    %1175 = vmatpush.msra.mxu0 0.0
    %1176 = vmatpush.msra.mxu0 %v564
    %1177 = vmatmul.f32.gmra.mxu0 %v1159
    %v1178 = vpop.f32.mrf.mxu0
    %v1179 = vadd.f32 0.0, %v1178
    %1180 = vdwg.mxu0
    %v1182 = vsel %vm586, %v1011, 0
    %1184 = vmatpush.msra.mxu0 0.0
    %1185 = vmatpush.msra.mxu0 0.0
    %1186 = vmatpush.msra.mxu0 0.0
    %1187 = vmatpush.msra.mxu0 0.0
    %1188 = vmatpush.msra.mxu0 0.0
    %1189 = vmatpush.msra.mxu0 0.0
    %1190 = vmatpush.msra.mxu0 0.0
    %1191 = vmatpush.msra.mxu0 0.0
    %1192 = vmatpush.msra.mxu0 0.0
    %1193 = vmatpush.msra.mxu0 0.0
    %1194 = vmatpush.msra.mxu0 0.0
    %1195 = vmatpush.msra.mxu0 0.0
    %1196 = vmatpush.msra.mxu0 0.0
    %1197 = vmatpush.msra.mxu0 0.0
    %1198 = vmatpush.msra.mxu0 0.0
    %1199 = vmatpush.msra.mxu0 %v584
    %1200 = vmatmul.f32.gmra.mxu0 %v1182
    %v1201 = vpop.f32.mrf.mxu0
    %v1202 = vadd.f32 0.0, %v1201
    %1203 = vdwg.mxu0
    %v1204 = vld [vmem:[%s6] sm:$0xff]
    %v1205 = vld [vmem:[%s6 + $0x8] sm:$0xff]
    %v1206 = vld [vmem:[%s6 + $0x10] sm:$0xff]
    %v1207 = vld [vmem:[%s6 + $0x18] sm:$0xff]
    %v1208 = vld [vmem:[%s6 + $0x20] sm:$0xff]
    %v1209 = vld [vmem:[%s6 + $0x28] sm:$0xff]
    %v1210 = vld [vmem:[%s6 + $0x30] sm:$0xff]
    %v1211 = vld [vmem:[%s6 + $0x38] sm:$0xff]
    %v1212 = vld [vmem:[%s6 + $0x40] sm:$0xff]
    %v1213 = vld [vmem:[%s6 + $0x48] sm:$0xff]
    %v1214 = vld [vmem:[%s6 + $0x50] sm:$0xff]
    %v1215 = vld [vmem:[%s6 + $0x58] sm:$0xff]
    %v1216 = vld [vmem:[%s6 + $0x60] sm:$0xff]
    %v1217 = vld [vmem:[%s6 + $0x68] sm:$0xff]
    %v1218 = vld [vmem:[%s6 + $0x70] sm:$0xff]
    %v1219 = vld [vmem:[%s6 + $0x78] sm:$0xff]
    %v1221 = vsel %vm586, %v1041, 0
    %v1224 = vsel %vm586, %v1204, 0
    %v1227 = vsel %vm586, %v1205, 0
    %v1230 = vsel %vm586, %v1206, 0
    %v1233 = vsel %vm586, %v1207, 0
    %1235 = vmatpush.xpose.msra.mxu0 0.0
    %1236 = vmatpush.xpose.msra.mxu0 0.0
    %1237 = vmatpush.xpose.msra.mxu0 0.0
    %1238 = vmatpush.xpose.msra.mxu0 0.0
    %1239 = vmatpush.xpose.msra.mxu0 0.0
    %1240 = vmatpush.xpose.msra.mxu0 0.0
    %1241 = vmatpush.xpose.msra.mxu0 0.0
    %1242 = vmatpush.xpose.msra.mxu0 0.0
    %1243 = vmatpush.xpose.msra.mxu0 0.0
    %1244 = vmatpush.xpose.msra.mxu0 0.0
    %1245 = vmatpush.xpose.msra.mxu0 0.0
    %1246 = vmatpush.xpose.msra.mxu0 0.0
    %1247 = vmatpush.xpose.msra.mxu0 %v1233
    %1248 = vmatpush.xpose.msra.mxu0 %v1230
    %1249 = vmatpush.xpose.msra.mxu0 %v1227
    %1250 = vmatpush.xpose.msra.mxu0 %v1224
    %1251 = vmatmul.f32.gmra.mxu0 %v1221
    %v1252 = vpop.f32.mrf.mxu0
    %v1253 = vadd.f32 0.0, %v1252
    %1254 = vdwg.mxu0
    %v1256 = vsel %vm586, %v1064, 0
    %v1259 = vsel %vm586, %v1208, 0
    %v1262 = vsel %vm586, %v1209, 0
    %v1265 = vsel %vm586, %v1210, 0
    %v1268 = vsel %vm586, %v1211, 0
    %1270 = vmatpush.xpose.msra.mxu0 0.0
    %1271 = vmatpush.xpose.msra.mxu0 0.0
    %1272 = vmatpush.xpose.msra.mxu0 0.0
    %1273 = vmatpush.xpose.msra.mxu0 0.0
    %1274 = vmatpush.xpose.msra.mxu0 0.0
    %1275 = vmatpush.xpose.msra.mxu0 0.0
    %1276 = vmatpush.xpose.msra.mxu0 0.0
    %1277 = vmatpush.xpose.msra.mxu0 0.0
    %1278 = vmatpush.xpose.msra.mxu0 0.0
    %1279 = vmatpush.xpose.msra.mxu0 0.0
    %1280 = vmatpush.xpose.msra.mxu0 0.0
    %1281 = vmatpush.xpose.msra.mxu0 0.0
    %1282 = vmatpush.xpose.msra.mxu0 %v1268
    %1283 = vmatpush.xpose.msra.mxu0 %v1265
    %1284 = vmatpush.xpose.msra.mxu0 %v1262
    %1285 = vmatpush.xpose.msra.mxu0 %v1259
    %1286 = vmatmul.f32.gmra.mxu0 %v1256
    %v1287 = vpop.f32.mrf.mxu0
    %v1288 = vadd.f32 0.0, %v1287
    %1289 = vdwg.mxu0
    %v1291 = vsel %vm586, %v1087, 0
    %v1294 = vsel %vm586, %v1212, 0
    %v1297 = vsel %vm586, %v1213, 0
    %v1300 = vsel %vm586, %v1214, 0
    %v1303 = vsel %vm586, %v1215, 0
    %1305 = vmatpush.xpose.msra.mxu0 0.0
    %1306 = vmatpush.xpose.msra.mxu0 0.0
    %1307 = vmatpush.xpose.msra.mxu0 0.0
    %1308 = vmatpush.xpose.msra.mxu0 0.0
    %1309 = vmatpush.xpose.msra.mxu0 0.0
    %1310 = vmatpush.xpose.msra.mxu0 0.0
    %1311 = vmatpush.xpose.msra.mxu0 0.0
    %1312 = vmatpush.xpose.msra.mxu0 0.0
    %1313 = vmatpush.xpose.msra.mxu0 0.0
    %1314 = vmatpush.xpose.msra.mxu0 0.0
    %1315 = vmatpush.xpose.msra.mxu0 0.0
    %1316 = vmatpush.xpose.msra.mxu0 0.0
    %1317 = vmatpush.xpose.msra.mxu0 %v1303
    %1318 = vmatpush.xpose.msra.mxu0 %v1300
    %1319 = vmatpush.xpose.msra.mxu0 %v1297
    %1320 = vmatpush.xpose.msra.mxu0 %v1294
    %1321 = vmatmul.f32.gmra.mxu0 %v1291
    %v1322 = vpop.f32.mrf.mxu0
    %v1323 = vadd.f32 0.0, %v1322
    %1324 = vdwg.mxu0
    %v1326 = vsel %vm586, %v1110, 0
    %v1329 = vsel %vm586, %v1216, 0
    %v1332 = vsel %vm586, %v1217, 0
    %v1335 = vsel %vm586, %v1218, 0
    %v1338 = vsel %vm586, %v1219, 0
    %1340 = vmatpush.xpose.msra.mxu0 0.0
    %1341 = vmatpush.xpose.msra.mxu0 0.0
    %1342 = vmatpush.xpose.msra.mxu0 0.0
    %1343 = vmatpush.xpose.msra.mxu0 0.0
    %1344 = vmatpush.xpose.msra.mxu0 0.0
    %1345 = vmatpush.xpose.msra.mxu0 0.0
    %1346 = vmatpush.xpose.msra.mxu0 0.0
    %1347 = vmatpush.xpose.msra.mxu0 0.0
    %1348 = vmatpush.xpose.msra.mxu0 0.0
    %1349 = vmatpush.xpose.msra.mxu0 0.0
    %1350 = vmatpush.xpose.msra.mxu0 0.0
    %1351 = vmatpush.xpose.msra.mxu0 0.0
    %1352 = vmatpush.xpose.msra.mxu0 %v1338
    %1353 = vmatpush.xpose.msra.mxu0 %v1335
    %1354 = vmatpush.xpose.msra.mxu0 %v1332
    %1355 = vmatpush.xpose.msra.mxu0 %v1329
    %1356 = vmatmul.f32.gmra.mxu0 %v1326
    %v1357 = vpop.f32.mrf.mxu0
    %v1358 = vadd.f32 0.0, %v1357
    %1359 = vdwg.mxu0
    %v1361 = vsel %vm586, %v1133, 0
    %1363 = vmatpush.xpose.msra.mxu0 0.0
    %1364 = vmatpush.xpose.msra.mxu0 0.0
    %1365 = vmatpush.xpose.msra.mxu0 0.0
    %1366 = vmatpush.xpose.msra.mxu0 0.0
    %1367 = vmatpush.xpose.msra.mxu0 0.0
    %1368 = vmatpush.xpose.msra.mxu0 0.0
    %1369 = vmatpush.xpose.msra.mxu0 0.0
    %1370 = vmatpush.xpose.msra.mxu0 0.0
    %1371 = vmatpush.xpose.msra.mxu0 0.0
    %1372 = vmatpush.xpose.msra.mxu0 0.0
    %1373 = vmatpush.xpose.msra.mxu0 0.0
    %1374 = vmatpush.xpose.msra.mxu0 0.0
    %1375 = vmatpush.xpose.msra.mxu0 %v1233
    %1376 = vmatpush.xpose.msra.mxu0 %v1230
    %1377 = vmatpush.xpose.msra.mxu0 %v1227
    %1378 = vmatpush.xpose.msra.mxu0 %v1224
    %1379 = vmatmul.f32.gmra.mxu0 %v1361
    %v1380 = vpop.f32.mrf.mxu0
    %v1381 = vadd.f32 0.0, %v1380
    %1382 = vdwg.mxu0
    %v1384 = vsel %vm586, %v1156, 0
    %1386 = vmatpush.xpose.msra.mxu0 0.0
    %1387 = vmatpush.xpose.msra.mxu0 0.0
    %1388 = vmatpush.xpose.msra.mxu0 0.0
    %1389 = vmatpush.xpose.msra.mxu0 0.0
    %1390 = vmatpush.xpose.msra.mxu0 0.0
    %1391 = vmatpush.xpose.msra.mxu0 0.0
    %1392 = vmatpush.xpose.msra.mxu0 0.0
    %1393 = vmatpush.xpose.msra.mxu0 0.0
    %1394 = vmatpush.xpose.msra.mxu0 0.0
    %1395 = vmatpush.xpose.msra.mxu0 0.0
    %1396 = vmatpush.xpose.msra.mxu0 0.0
    %1397 = vmatpush.xpose.msra.mxu0 0.0
    %1398 = vmatpush.xpose.msra.mxu0 %v1268
    %1399 = vmatpush.xpose.msra.mxu0 %v1265
    %1400 = vmatpush.xpose.msra.mxu0 %v1262
    %1401 = vmatpush.xpose.msra.mxu0 %v1259
    %1402 = vmatmul.f32.gmra.mxu0 %v1384
    %v1403 = vpop.f32.mrf.mxu0
    %v1404 = vadd.f32 0.0, %v1403
    %1405 = vdwg.mxu0
    %v1407 = vsel %vm586, %v1179, 0
    %1409 = vmatpush.xpose.msra.mxu0 0.0
    %1410 = vmatpush.xpose.msra.mxu0 0.0
    %1411 = vmatpush.xpose.msra.mxu0 0.0
    %1412 = vmatpush.xpose.msra.mxu0 0.0
    %1413 = vmatpush.xpose.msra.mxu0 0.0
    %1414 = vmatpush.xpose.msra.mxu0 0.0
    %1415 = vmatpush.xpose.msra.mxu0 0.0
    %1416 = vmatpush.xpose.msra.mxu0 0.0
    %1417 = vmatpush.xpose.msra.mxu0 0.0
    %1418 = vmatpush.xpose.msra.mxu0 0.0
    %1419 = vmatpush.xpose.msra.mxu0 0.0
    %1420 = vmatpush.xpose.msra.mxu0 0.0
    %1421 = vmatpush.xpose.msra.mxu0 %v1303
    %1422 = vmatpush.xpose.msra.mxu0 %v1300
    %1423 = vmatpush.xpose.msra.mxu0 %v1297
    %1424 = vmatpush.xpose.msra.mxu0 %v1294
    %1425 = vmatmul.f32.gmra.mxu0 %v1407
    %v1426 = vpop.f32.mrf.mxu0
    %v1427 = vadd.f32 0.0, %v1426
    %1428 = vdwg.mxu0
    %v1430 = vsel %vm586, %v1202, 0
    %1432 = vmatpush.xpose.msra.mxu0 0.0
    %1433 = vmatpush.xpose.msra.mxu0 0.0
    %1434 = vmatpush.xpose.msra.mxu0 0.0
    %1435 = vmatpush.xpose.msra.mxu0 0.0
    %1436 = vmatpush.xpose.msra.mxu0 0.0
    %1437 = vmatpush.xpose.msra.mxu0 0.0
    %1438 = vmatpush.xpose.msra.mxu0 0.0
    %1439 = vmatpush.xpose.msra.mxu0 0.0
    %1440 = vmatpush.xpose.msra.mxu0 0.0
    %1441 = vmatpush.xpose.msra.mxu0 0.0
    %1442 = vmatpush.xpose.msra.mxu0 0.0
    %1443 = vmatpush.xpose.msra.mxu0 0.0
    %1444 = vmatpush.xpose.msra.mxu0 %v1338
    %1445 = vmatpush.xpose.msra.mxu0 %v1335
    %1446 = vmatpush.xpose.msra.mxu0 %v1332
    %1447 = vmatpush.xpose.msra.mxu0 %v1329
    %1448 = vmatmul.f32.gmra.mxu0 %v1430
    %v1449 = vpop.f32.mrf.mxu0
    %v1450 = vadd.f32 0.0, %v1449
    %1451 = vdwg.mxu0
    %v1452 = vadd.f32 %v1253, %v1288
    %v1453 = vadd.f32 %v1381, %v1404
    %v1454 = vadd.f32 %v1452, %v1323
    %v1455 = vadd.f32 %v1453, %v1427
    %v1456 = vadd.f32 %v1454, %v1358
    %v1457 = vadd.f32 %v1455, %v1450
    %v1458 = vadd.f32 %v1456, %v33
    %v1459 = vadd.f32 %v1457, %v34
    %v1460 = vsel %vm39, %v1458, 0.0
    %1461 = vadd.xlane.f32.xlu0 %v1460
    %v1462 = vpop.xlane.xlu0 %1461
    %v1463 = vsel %vm39, %v1459, 0.0
    %1464 = vadd.xlane.f32.xlu0 %v1463
    %v1465 = vpop.xlane.xlu0 %1464
    %v1466 = vrcp.pop 32.0
    %v1467 = vmul.f32 32.0, %v1466
    %v1468 = vsub.f32 1.0, %v1467
    %v1469 = vmul.f32 %v1466, %v1468
    %v1470 = vadd.f32 %v1466, %v1469
    %vm1471 = vweird.f32 %v1466
    %v1472 = vsel %vm1471, %v1466, %v1470
    %v1473 = vmul.f32 %v1462, %v1472
    %v1474 = vmul.f32 %v1465, %v1472
    %v1475 = vsub.f32 %v1458, %v1473
    %v1476 = vsub.f32 %v1459, %v1474
    %v1477 = vmul.f32 %v1475, %v1475
    %v1478 = vmul.f32 %v1476, %v1476
    %v1479 = vsel %vm39, %v1477, 0.0
    %1480 = vadd.xlane.f32.xlu0 %v1479
    %v1481 = vpop.xlane.xlu0 %1480
    %v1482 = vsel %vm39, %v1478, 0.0
    %1483 = vadd.xlane.f32.xlu0 %v1482
    %v1484 = vpop.xlane.xlu0 %1483
    %v1485 = vmul.f32 %v1481, %v1472
    %v1486 = vmul.f32 %v1484, %v1472
    %v1487 = vadd.f32 %v1485, 1e-05
    %v1488 = vadd.f32 %v1486, 1e-05
    %v1489 = vrsqrt.pop %v1487
    %v1490 = vmul.f32 %v1489, %v1487
    %v1491 = vmul.f32 %v1490, %v1489
    %v1492 = vmul.f32 0.5, %v1491
    %v1493 = vsub.f32 1.5, %v1492
    %v1494 = vmul.f32 %v1489, %v1493
    %vm1495 = vweird.f32 %v1487
    %vm1496 = vweird.f32 %v1489
    %vm1497 = vmor %vm1495, %vm1496
    %v1498 = vsel %vm1497, %v1489, %v1494
    %v1499 = vrsqrt.pop %v1488
    %v1500 = vmul.f32 %v1499, %v1488
    %v1501 = vmul.f32 %v1500, %v1499
    %v1502 = vmul.f32 0.5, %v1501
    %v1503 = vsub.f32 1.5, %v1502
    %v1504 = vmul.f32 %v1499, %v1503
    %vm1505 = vweird.f32 %v1488
    %vm1506 = vweird.f32 %v1499
    %vm1507 = vmor %vm1505, %vm1506
    %v1508 = vsel %vm1507, %v1499, %v1504
    %v1509 = vmul.f32 %v1475, %v1498
    %v1510 = vmul.f32 %v1476, %v1508
    %1511 = vst.msk [vmem:[#allocation2] sm:$0xff] %vm39, %v1509
    %1512 = vst.msk [vmem:[#allocation2 + $0x8] sm:$0xff] %vm39, %v1510
    // Predicated region
    $region34: #{multi_head_attention.1} parent=1 // pred_check
      _
    $region35: #{multi_head_attention.1} parent=1 // pred_check_branch
      %1514 = sbr.rel (0) target = $region37
    $region36: #{multi_head_attention.1} parent=1 // pred_region
      %1516 = vsyncadd [#allocation3], 0
      %s1517 = sshll.u32 [#allocation2], 4
      %s1518 = int_to_ptr.vmem [resolvable:$true] %s1517
      %s1519 = sshll.u32 %s8, 4
      %s1520 = int_to_ptr.hbm [resolvable:$true] %s1519
      %1525 = dma.vmem_to_hbm [thread:$0]  %s1518, 256, %s1520, [#allocation3], 128, 128, 8
    $region37: #{multi_head_attention.1} parent=1 // pred_fallthru
      _
    // Predicated region
    $region38: #{multi_head_attention.1} parent=1 // pred_check
      _
    $region39: #{multi_head_attention.1} parent=1 // pred_check_branch
      %1527 = sbr.rel (0) target = $region41
    $region40: #{multi_head_attention.1} parent=1 // pred_region
      %1529 = vsyncadd [#allocation5], 0
      %s1530 = sshll.u32 [#allocation4], 4
      %s1531 = int_to_ptr.vmem [resolvable:$true] %s1530
      %s1532 = sshll.u32 %s9, 4
      %s1533 = int_to_ptr.hbm [resolvable:$true] %s1532
      %1538 = dma.vmem_to_hbm [thread:$0]  %s1531, 1024, %s1533, [#allocation5], 128, 128, 8
    $region41: #{multi_head_attention.1} parent=1 // pred_fallthru
      _
    // Predicated region
    $region42: #{multi_head_attention.1} parent=1 // pred_check
      _
    $region43: #{multi_head_attention.1} parent=1 // pred_check_branch
      %1540 = sbr.rel (0) target = $region45
    $region44: #{multi_head_attention.1} parent=1 // pred_region
      %1542 = dma.done [#allocation3], 256
    $region45: #{multi_head_attention.1} parent=1 // pred_fallthru
      _
    // Predicated region
    $region46: #{multi_head_attention.1} parent=1 // pred_check
      _
    $region47: #{multi_head_attention.1} parent=1 // pred_check_branch
      %1544 = sbr.rel (0) target = $region49
    $region48: #{multi_head_attention.1} parent=1 // pred_region
      %1546 = dma.done [#allocation5], 1024
    $region49: #{multi_head_attention.1} parent=1 // pred_fallthru
      _
    %1547 = vsyncpa [#allocation3], 1
    %1548 = vsyncpa [#allocation5], 1

</llo_original>
